<compile_context>
chip_gen: v7x
topology: tpu7x:2x2x1
jax: 0.10.0
libtpu: 0.0.40
codegen_flags: <defaults>
</compile_context>

<pallas_src>
import functools
import math

import jax
import jax.numpy as jnp
from jax import lax
from jax.experimental import pallas as pl
from jax.experimental.pallas import tpu as pltpu

LN_EPS = 1e-5


# ----------------------------------------------------------------------------
# shared in-kernel helpers
# ----------------------------------------------------------------------------
def _layernorm(z, g, b):
    mu = jnp.mean(z, axis=-1, keepdims=True)
    c = z - mu
    var = jnp.mean(c * c, axis=-1, keepdims=True)
    return c * lax.rsqrt(var + LN_EPS) * g + b


def _mxu(a, w_bf16):
    # bf16 operands (weights are already bf16 host-side), f32 accumulation.
    return jnp.dot(a.astype(jnp.bfloat16), w_bf16,
                   preferred_element_type=jnp.float32)


# ----------------------------------------------------------------------------
# pass 1: LN1 + fused K/V projection, written head-major to HBM (once per row)
# ----------------------------------------------------------------------------
def ln1_kv_kernel(x_ref, ln1_g_ref, ln1_b_ref, wkv_ref, bkv_ref,
                  k_ref, v_ref, *, num_heads, head_dim):
    d = num_heads * head_dim
    x = x_ref[...]                                          # (TKV, D) f32
    z1 = _layernorm(x, ln1_g_ref[...], ln1_b_ref[...])
    kv = _mxu(z1, wkv_ref[...]) + bkv_ref[...]              # (TKV, 2D) f32
    rows = kv.shape[0]
    k = pltpu.einshape("mhd->hmd", kv[:, :d].reshape(rows, num_heads, head_dim))
    v = pltpu.einshape("mhd->hmd", kv[:, d:].reshape(rows, num_heads, head_dim))
    k_ref[...] = k.astype(k_ref.dtype)                      # (H, TKV, hd) bf16
    v_ref[...] = v.astype(v_ref.dtype)


# ----------------------------------------------------------------------------
# pass 2: per-query-tile attention (consuming precomputed head-major KV) + MLP
# ----------------------------------------------------------------------------
def attn_mlp_kernel(x_ref, k_ref, v_ref,
                    ln1_g_ref, ln1_b_ref, wq_ref, bq_ref,
                    ln2_g_ref, ln2_b_ref, w1_ref, b1_ref, w2_ref, b2_ref,
                    o_ref, *, num_heads, head_dim, q_tile):
    d = num_heads * head_dim

    x_q = x_ref[...]                                        # (TQ, D) f32 (query tile only)
    z1_q = _layernorm(x_q, ln1_g_ref[...], ln1_b_ref[...])
    # 1/sqrt(head_dim) is pre-folded into wq / bq host-side (exact).
    q = _mxu(z1_q, wq_ref[...]) + bq_ref[...]               # (TQ, D) f32
    q3 = pltpu.einshape("mhd->hmd",
                        q.reshape(q_tile, num_heads, head_dim))    # (H, TQ, hd)

    k3 = k_ref[...]                                         # (H, N, hd) bf16, precomputed
    v3 = v_ref[...]                                         # (H, N, hd) bf16, precomputed

    # scores (H, TQ, N): contract head_dim, batch over heads -- no transposes.
    s = lax.dot_general(q3.astype(jnp.bfloat16), k3,
                        dimension_numbers=(((2,), (2,)), ((0,), (0,))),
                        preferred_element_type=jnp.float32)
    s = s - jnp.max(s, axis=-1, keepdims=True)
    p = jnp.exp(s)
    denom = jnp.sum(p, axis=-1, keepdims=True)              # (H, TQ, 1)

    # PV with unnormalized p; normalize the small (H, TQ, hd) result afterwards.
    o = lax.dot_general(p.astype(jnp.bfloat16), v3,
                        dimension_numbers=(((2,), (1,)), ((0,), (0,))),
                        preferred_element_type=jnp.float32)
    o = o * pl.reciprocal(denom, approx=True)
    attn = pltpu.einshape("hmd->mhd", o).reshape(q_tile, d)  # (TQ, D)
    # MSA dropout rate is 0.0 -> identity; return_attn ignored.

    s1 = x_q + attn
    z2 = _layernorm(s1, ln2_g_ref[...], ln2_b_ref[...])
    h1 = jnp.maximum(_mxu(z2, w1_ref[...]) + b1_ref[...], 0.0)
    mlp = _mxu(h1, w2_ref[...]) + b2_ref[...]
    o_ref[...] = (s1 + mlp).astype(o_ref.dtype)


# ----------------------------------------------------------------------------
# host-side wrapper
# ----------------------------------------------------------------------------
def _vmem_limit_bytes():
    cap = 128 * 1024 * 1024
    try:
        cap = int(getattr(pltpu.get_tpu_info(), "vmem_capacity_bytes", cap))
    except Exception:
        pass
    # Leave ~25% headroom for compiler-internal scratch / pipeline buffers:
    # v7x (64 MiB total) -> ~48 MiB; v5e/v6e (128 MiB) -> capped at 100 MiB.
    return min((cap * 3) // 4, 100 * 1024 * 1024)


def _pick_tile(n, vmem_bytes):
    # Prefer large tiles (amortize per-grid-step overhead, fill the MXU M dim);
    # 512 when the generous v5e/v6e VMEM budget allows, 256 otherwise (v7x).
    max_tile = 512 if vmem_bytes >= 96 * 1024 * 1024 else 256
    if n <= max_tile:
        return n
    for t in (512, 256, 128, 64, 32, 16, 8):
        if t <= max_tile and n % t == 0:
            return t
    return n


def _const_spec(arr, single_buffer):
    # Full-array block whose index never changes: single-buffer when supported.
    nd = arr.ndim
    kwargs = dict(pipeline_mode=pl.Buffered(1)) if single_buffer else {}
    return pl.BlockSpec(arr.shape, lambda bi, si, _nd=nd: (0,) * _nd, **kwargs)


def _forward(x, params, *, num_heads, q_tile, kv_tile, single_buffer_params):
    b, n, d = x.shape
    head_dim = d // num_heads
    factor = 1.0 / math.sqrt(head_dim)
    mlp_hidden = params["w1"].shape[1]
    vmem_limit = _vmem_limit_bytes()

    if q_tile is None:
        q_tile = _pick_tile(n, vmem_limit)
    if kv_tile is None:
        kv_tile = _pick_tile(n, vmem_limit)
    assert n % q_tile == 0 and n % kv_tile == 0, "seq must divide tile sizes"

    # Host-side weight prep: fold attention scale into Q (exact), fuse K/V into
    # one matmul, and convert all weight matrices to bf16 (halves DMA + VMEM).
    bf16 = jnp.bfloat16
    wq = (params["wq"] * factor).astype(bf16)
    bq = params["bq"] * factor
    w_kv = jnp.concatenate([params["wk"], params["wv"]], axis=1).astype(bf16)
    b_kv = jnp.concatenate([params["bk"], params["bv"]], axis=1)
    w1 = params["w1"].astype(bf16)
    w2 = params["w2"].astype(bf16)

    cparams = pltpu.CompilerParams(
        dimension_semantics=("parallel", "parallel"),
        vmem_limit_bytes=vmem_limit)

    # ---- pass 1: LN1 + fused K/V projection -> head-major bf16 K/V in HBM ----
    p1_params = [params["ln1_g"], params["ln1_b"], w_kv, b_kv]
    p1_in_specs = ([pl.BlockSpec((pl.Squeezed(), kv_tile, d),
                                 lambda bi, si: (bi, si, 0))]
                   + [_const_spec(a, single_buffer_params) for a in p1_params])
    kv_shape = jax.ShapeDtypeStruct((b, num_heads, n, head_dim), bf16)
    kv_out_spec = pl.BlockSpec((pl.Squeezed(), num_heads, kv_tile, head_dim),
                               lambda bi, si: (bi, 0, si, 0))

    k_hm, v_hm = pl.pallas_call(
        functools.partial(ln1_kv_kernel, num_heads=num_heads, head_dim=head_dim),
        out_shape=(kv_shape, kv_shape),
        grid_spec=pltpu.PrefetchScalarGridSpec(
            num_scalar_prefetch=0,
            grid=(b, n // kv_tile),
            in_specs=p1_in_specs,
            out_specs=(kv_out_spec, kv_out_spec)),
        compiler_params=cparams,
        cost_estimate=pl.CostEstimate(
            flops=4 * b * n * d * d,
            transcendentals=b * n,
            bytes_accessed=b * n * d * 4 + 2 * d * d * 2 + 2 * b * n * d * 2),
    )(x, *p1_params)

    # ---- pass 2: query-tiled attention (precomputed KV) + residual MLP ----
    p2_params = [params["ln1_g"], params["ln1_b"], wq, bq,
                 params["ln2_g"], params["ln2_b"],
                 w1, params["b1"], w2, params["b2"]]
    kv_in_spec = pl.BlockSpec((pl.Squeezed(), num_heads, n, head_dim),
                              lambda bi, qi: (bi, 0, 0, 0))
    p2_in_specs = ([pl.BlockSpec((pl.Squeezed(), q_tile, d),
                                 lambda bi, qi: (bi, qi, 0)),
                    kv_in_spec, kv_in_spec]
                   + [_const_spec(a, single_buffer_params) for a in p2_params])

    return pl.pallas_call(
        functools.partial(attn_mlp_kernel, num_heads=num_heads,
                          head_dim=head_dim, q_tile=q_tile),
        out_shape=jax.ShapeDtypeStruct((b, n, d), x.dtype),
        grid_spec=pltpu.PrefetchScalarGridSpec(
            num_scalar_prefetch=0,
            grid=(b, n // q_tile),
            in_specs=p2_in_specs,
            out_specs=pl.BlockSpec((pl.Squeezed(), q_tile, d),
                                   lambda bi, qi: (bi, qi, 0))),
        compiler_params=cparams,
        cost_estimate=pl.CostEstimate(
            flops=(2 * b * n * d * d            # Q projection
                   + 4 * b * n * n * d          # QK^T + PV
                   + 4 * b * n * d * mlp_hidden),   # MLP
            transcendentals=b * num_heads * n * n + 2 * b * n,
            bytes_accessed=(b * n * d * 4 + 2 * b * n * d * 2
                            + (d * d + 2 * d * mlp_hidden) * 2
                            + b * n * d * 4)),
    )(x, k_hm, v_hm, *p2_params)


def transformer_block(x, params, *, num_heads, q_tile=None, kv_tile=None):
    try:
        out = _forward(x, params, num_heads=num_heads, q_tile=q_tile,
                       kv_tile=kv_tile, single_buffer_params=True)
        return jax.block_until_ready(out)
    except Exception:
        # pl.Buffered(1) (single-buffered constant-index params) not supported
        # by this build -- fall back to default double buffering.
        return _forward(x, params, num_heads=num_heads, q_tile=q_tile,
                        kv_tile=kv_tile, single_buffer_params=False)


# ----------------------------------------------------------------------------
# pure-JAX reference + test harness
# ----------------------------------------------------------------------------
def reference(x, p, *, num_heads):
    b, n, d = x.shape
    hd = d // num_heads

    def ln(z, g, b_):
        mu = jnp.mean(z, -1, keepdims=True)
        var = jnp.mean((z - mu) ** 2, -1, keepdims=True)
        return (z - mu) / jnp.sqrt(var + LN_EPS) * g + b_

    z1 = ln(x, p["ln1_g"], p["ln1_b"])
    q = (z1 @ p["wq"] + p["bq"]).reshape(b, n, num_heads, hd)
    k = (z1 @ p["wk"] + p["bk"]).reshape(b, n, num_heads, hd)
    v = (z1 @ p["wv"] + p["bv"]).reshape(b, n, num_heads, hd)
    scores = jnp.einsum("bihp,bjhp->bhij", q, k) / math.sqrt(hd)
    attn = jax.nn.softmax(scores, axis=-1)
    out = jnp.einsum("bhij,bjhp->bihp", attn, v).reshape(b, n, d)
    s1 = x + out
    z2 = ln(s1, p["ln2_g"], p["ln2_b"])
    mlp = jnp.maximum(z2 @ p["w1"] + p["b1"], 0.0) @ p["w2"] + p["b2"]
    return s1 + mlp


def init_params(key, hidden_dim, mlp_hidden):
    ks = jax.random.split(key, 6)
    scale = 0.05
    return {
        "ln1_g": jnp.ones((1, hidden_dim), jnp.float32),
        "ln1_b": jnp.zeros((1, hidden_dim), jnp.float32),
        "wq": scale * jax.random.normal(ks[0], (hidden_dim, hidden_dim), jnp.float32),
        "bq": jnp.zeros((1, hidden_dim), jnp.float32),
        "wk": scale * jax.random.normal(ks[1], (hidden_dim, hidden_dim), jnp.float32),
        "bk": jnp.zeros((1, hidden_dim), jnp.float32),
        "wv": scale * jax.random.normal(ks[2], (hidden_dim, hidden_dim), jnp.float32),
        "bv": jnp.zeros((1, hidden_dim), jnp.float32),
        "ln2_g": jnp.ones((1, hidden_dim), jnp.float32),
        "ln2_b": jnp.zeros((1, hidden_dim), jnp.float32),
        "w1": scale * jax.random.normal(ks[3], (hidden_dim, mlp_hidden), jnp.float32),
        "b1": 0.01 * jnp.ones((1, mlp_hidden), jnp.float32),
        "w2": scale * jax.random.normal(ks[4], (mlp_hidden, hidden_dim), jnp.float32),
        "b2": 0.01 * jnp.ones((1, hidden_dim), jnp.float32),
    }


if __name__ == "__main__":
    B, N, D = 2, 8, 32          # batch, seq, hidden_dim (== input_dim)
    NUM_HEADS = 4               # head_dim = 8
    MLP_HIDDEN = 64

    key = jax.random.PRNGKey(0)
    kx, kp = jax.random.split(key)
    x = jax.random.normal(kx, (B, N, D), jnp.float32)
    params = init_params(kp, D, MLP_HIDDEN)

    out = transformer_block(x, params, num_heads=NUM_HEADS)
    out = jax.block_until_ready(out)

    ref = reference(x, params, num_heads=NUM_HEADS)
    assert out.shape == (B, N, D)
    # bf16 matmul operands/weights + approx reciprocal -> loosened tolerance
    assert jnp.allclose(out, ref, rtol=2e-2, atol=2e-2), "mismatch vs reference"

    print("KERNEL_OK")
</pallas_src>

<mosaic_0001>
module attributes {stable_mosaic.version = 11 : i64} {
  func.func @ln1_kv_kernel(%arg0: i32, %arg1: i32, %arg2: memref<1x8x32xf32, #tpu.memory_space<vmem>>, %arg3: memref<1x32xf32, #tpu.memory_space<vmem>>, %arg4: memref<1x32xf32, #tpu.memory_space<vmem>>, %arg5: memref<32x64xbf16, #tpu.memory_space<vmem>>, %arg6: memref<1x64xf32, #tpu.memory_space<vmem>>, %arg7: memref<1x4x8x8xbf16, #tpu.memory_space<vmem>>, %arg8: memref<1x4x8x8xbf16, #tpu.memory_space<vmem>>) attributes {dimension_semantics = [#tpu.dimension_semantics<parallel>, #tpu.dimension_semantics<parallel>], iteration_bounds = array<i64: 2, 1>, scalar_prefetch = 0 : i64, scratch_operands = 0 : i64, tpu.core_type = #tpu.core_type<tc>, window_params = [{transform_indices = @transform_0, window_bounds = array<i64: 1, 8, 32>}, {pipeline_mode = #tpu.pipeline_mode<synchronous>, transform_indices = @transform_1, window_bounds = array<i64: 1, 32>}, {pipeline_mode = #tpu.pipeline_mode<synchronous>, transform_indices = @transform_2, window_bounds = array<i64: 1, 32>}, {pipeline_mode = #tpu.pipeline_mode<synchronous>, transform_indices = @transform_3, window_bounds = array<i64: 32, 64>}, {pipeline_mode = #tpu.pipeline_mode<synchronous>, transform_indices = @transform_4, window_bounds = array<i64: 1, 64>}, {transform_indices = @transform_5, window_bounds = array<i64: 1, 4, 8, 8>}, {transform_indices = @transform_6, window_bounds = array<i64: 1, 4, 8, 8>}]} {
    %c0 = arith.constant 0 : index
    %c0_0 = arith.constant 0 : index
    %c0_1 = arith.constant 0 : index
    %0 = vector.load %arg2[%c0, %c0_0, %c0_1] : memref<1x8x32xf32, #tpu.memory_space<vmem>>, vector<1x8x32xf32>
    %1 = vector.shape_cast %0 : vector<1x8x32xf32> to vector<8x32xf32>
    %c0_2 = arith.constant 0 : index
    %c0_3 = arith.constant 0 : index
    %2 = vector.load %arg3[%c0_2, %c0_3] : memref<1x32xf32, #tpu.memory_space<vmem>>, vector<1x32xf32>
    %c0_4 = arith.constant 0 : index
    %c0_5 = arith.constant 0 : index
    %3 = vector.load %arg4[%c0_4, %c0_5] : memref<1x32xf32, #tpu.memory_space<vmem>>, vector<1x32xf32>
    %cst = arith.constant dense<0.000000e+00> : vector<8xf32>
    %4 = vector.multi_reduction <add>, %1, %cst [1] : vector<8x32xf32> to vector<8xf32>
    %5 = vector.shape_cast %4 : vector<8xf32> to vector<8x1xf32>
    %cst_6 = arith.constant 3.200000e+01 : f32
    %6 = vector.broadcast %cst_6 : f32 to vector<8x1xf32>
    %7 = arith.divf %5, %6 : vector<8x1xf32>
    %8 = vector.broadcast %7 : vector<8x1xf32> to vector<8x32xf32>
    %9 = arith.subf %1, %8 : vector<8x32xf32>
    %10 = arith.mulf %9, %9 : vector<8x32xf32>
    %cst_7 = arith.constant dense<0.000000e+00> : vector<8xf32>
    %11 = vector.multi_reduction <add>, %10, %cst_7 [1] : vector<8x32xf32> to vector<8xf32>
    %12 = vector.shape_cast %11 : vector<8xf32> to vector<8x1xf32>
    %cst_8 = arith.constant 3.200000e+01 : f32
    %13 = vector.broadcast %cst_8 : f32 to vector<8x1xf32>
    %14 = arith.divf %12, %13 : vector<8x1xf32>
    %cst_9 = arith.constant 9.99999974E-6 : f32
    %15 = vector.broadcast %cst_9 : f32 to vector<8x1xf32>
    %16 = arith.addf %14, %15 : vector<8x1xf32>
    %17 = math.rsqrt %16 : vector<8x1xf32>
    %18 = vector.broadcast %17 : vector<8x1xf32> to vector<8x32xf32>
    %19 = arith.mulf %9, %18 : vector<8x32xf32>
    %20 = vector.broadcast %2 : vector<1x32xf32> to vector<8x32xf32>
    %21 = arith.mulf %19, %20 : vector<8x32xf32>
    %22 = vector.broadcast %3 : vector<1x32xf32> to vector<8x32xf32>
    %23 = arith.addf %21, %22 : vector<8x32xf32>
    %c0_10 = arith.constant 0 : index
    %c0_11 = arith.constant 0 : index
    %24 = vector.load %arg5[%c0_10, %c0_11] : memref<32x64xbf16, #tpu.memory_space<vmem>>, vector<32x64xbf16>
    %25 = arith.truncf %23 : vector<8x32xf32> to vector<8x32xbf16>
    %cst_12 = arith.constant dense<0.000000e+00> : vector<8x64xf32>
    %26 = tpu.matmul %25, %24, %cst_12 {dimension_numbers = #tpu.dot_dimension_numbers<[1], [0], [0], [1], [0, 0, 1, 1], [], []>} : vector<8x32xbf16>, vector<32x64xbf16>, vector<8x64xf32> -> vector<8x64xf32>
    %c0_13 = arith.constant 0 : index
    %c0_14 = arith.constant 0 : index
    %27 = vector.load %arg6[%c0_13, %c0_14] : memref<1x64xf32, #tpu.memory_space<vmem>>, vector<1x64xf32>
    %28 = vector.broadcast %27 : vector<1x64xf32> to vector<8x64xf32>
    %29 = arith.addf %26, %28 : vector<8x64xf32>
    %30 = vector.extract_strided_slice %29 {offsets = [0, 0], sizes = [8, 32], strides = [1, 1]} : vector<8x64xf32> to vector<8x32xf32>
    %31 = vector.shape_cast %30 : vector<8x32xf32> to vector<8x4x8xf32>
    %32 = tpu.transpose %31, [1, 0, 2] : vector<8x4x8xf32> -> vector<4x8x8xf32>
    %33 = vector.extract_strided_slice %29 {offsets = [0, 32], sizes = [8, 32], strides = [1, 1]} : vector<8x64xf32> to vector<8x32xf32>
    %34 = vector.shape_cast %33 : vector<8x32xf32> to vector<8x4x8xf32>
    %35 = tpu.transpose %34, [1, 0, 2] : vector<8x4x8xf32> -> vector<4x8x8xf32>
    %36 = arith.truncf %32 : vector<4x8x8xf32> to vector<4x8x8xbf16>
    %c0_15 = arith.constant 0 : index
    %c0_16 = arith.constant 0 : index
    %c0_17 = arith.constant 0 : index
    %c0_18 = arith.constant 0 : index
    %37 = vector.load %arg7[%c0_15, %c0_16, %c0_17, %c0_18] : memref<1x4x8x8xbf16, #tpu.memory_space<vmem>>, vector<1x4x8x8xbf16>
    %38 = vector.shape_cast %37 : vector<1x4x8x8xbf16> to vector<4x8x8xbf16>
    %39 = vector.shape_cast %36 : vector<4x8x8xbf16> to vector<1x4x8x8xbf16>
    tpu.vector_store %arg7[%c0_15, %c0_16, %c0_17, %c0_18], %39 {strides = array<i32>} : memref<1x4x8x8xbf16, #tpu.memory_space<vmem>>, vector<1x4x8x8xbf16>,
    %40 = arith.truncf %35 : vector<4x8x8xf32> to vector<4x8x8xbf16>
    %c0_19 = arith.constant 0 : index
    %c0_20 = arith.constant 0 : index
    %c0_21 = arith.constant 0 : index
    %c0_22 = arith.constant 0 : index
    %41 = vector.load %arg8[%c0_19, %c0_20, %c0_21, %c0_22] : memref<1x4x8x8xbf16, #tpu.memory_space<vmem>>, vector<1x4x8x8xbf16>
    %42 = vector.shape_cast %41 : vector<1x4x8x8xbf16> to vector<4x8x8xbf16>
    %43 = vector.shape_cast %40 : vector<4x8x8xbf16> to vector<1x4x8x8xbf16>
    tpu.vector_store %arg8[%c0_19, %c0_20, %c0_21, %c0_22], %43 {strides = array<i32>} : memref<1x4x8x8xbf16, #tpu.memory_space<vmem>>, vector<1x4x8x8xbf16>,
    return
  }
  func.func @transform_0(%arg0: i32, %arg1: i32) -> (i32, i32, i32) {
    %c0_i32 = arith.constant 0 : i32
    %c0_i32_0 = arith.constant 0 : i32
    return %arg0, %arg1, %c0_i32 : i32, i32, i32
  }
  func.func @transform_1(%arg0: i32, %arg1: i32) -> (i32, i32) {
    %c0_i32 = arith.constant 0 : i32
    %c0_i32_0 = arith.constant 0 : i32
    %c0_i32_1 = arith.constant 0 : i32
    return %c0_i32, %c0_i32_0 : i32, i32
  }
  func.func @transform_2(%arg0: i32, %arg1: i32) -> (i32, i32) {
    %c0_i32 = arith.constant 0 : i32
    %c0_i32_0 = arith.constant 0 : i32
    %c0_i32_1 = arith.constant 0 : i32
    return %c0_i32, %c0_i32_0 : i32, i32
  }
  func.func @transform_3(%arg0: i32, %arg1: i32) -> (i32, i32) {
    %c0_i32 = arith.constant 0 : i32
    %c0_i32_0 = arith.constant 0 : i32
    %c0_i32_1 = arith.constant 0 : i32
    return %c0_i32, %c0_i32_0 : i32, i32
  }
  func.func @transform_4(%arg0: i32, %arg1: i32) -> (i32, i32) {
    %c0_i32 = arith.constant 0 : i32
    %c0_i32_0 = arith.constant 0 : i32
    %c0_i32_1 = arith.constant 0 : i32
    return %c0_i32, %c0_i32_0 : i32, i32
  }
  func.func @transform_5(%arg0: i32, %arg1: i32) -> (i32, i32, i32, i32) {
    %c0_i32 = arith.constant 0 : i32
    %c0_i32_0 = arith.constant 0 : i32
    %c0_i32_1 = arith.constant 0 : i32
    return %arg0, %c0_i32, %arg1, %c0_i32_0 : i32, i32, i32, i32
  }
  func.func @transform_6(%arg0: i32, %arg1: i32) -> (i32, i32, i32, i32) {
    %c0_i32 = arith.constant 0 : i32
    %c0_i32_0 = arith.constant 0 : i32
    %c0_i32_1 = arith.constant 0 : i32
    return %arg0, %c0_i32, %arg1, %c0_i32_0 : i32, i32, i32, i32
  }
}

module attributes {stable_mosaic.version = 11 : i64} {
  func.func @ln1_kv_kernel(%arg0: i32, %arg1: i32, %arg2: memref<1x8x32xf32, #tpu.memory_space<vmem>>, %arg3: memref<1x32xf32, #tpu.memory_space<vmem>>, %arg4: memref<1x32xf32, #tpu.memory_space<vmem>>, %arg5: memref<32x64xbf16, #tpu.memory_space<vmem>>, %arg6: memref<1x64xf32, #tpu.memory_space<vmem>>, %arg7: memref<1x4x8x8xbf16, #tpu.memory_space<vmem>>, %arg8: memref<1x4x8x8xbf16, #tpu.memory_space<vmem>>) attributes {dimension_semantics = [#tpu.dimension_semantics<parallel>, #tpu.dimension_semantics<parallel>], iteration_bounds = array<i64: 2, 1>, scalar_prefetch = 0 : i64, scratch_operands = 0 : i64, tpu.core_type = #tpu.core_type<tc>, window_params = [{transform_indices = @transform_0, window_bounds = array<i64: 1, 8, 32>}, {pipeline_mode = #tpu.pipeline_mode<synchronous>, transform_indices = @transform_1, window_bounds = array<i64: 1, 32>}, {pipeline_mode = #tpu.pipeline_mode<synchronous>, transform_indices = @transform_2, window_bounds = array<i64: 1, 32>}, {pipeline_mode = #tpu.pipeline_mode<synchronous>, transform_indices = @transform_3, window_bounds = array<i64: 32, 64>}, {pipeline_mode = #tpu.pipeline_mode<synchronous>, transform_indices = @transform_4, window_bounds = array<i64: 1, 64>}, {transform_indices = @transform_5, window_bounds = array<i64: 1, 4, 8, 8>}, {transform_indices = @transform_6, window_bounds = array<i64: 1, 4, 8, 8>}]} {
    %c0 = arith.constant 0 : index
    %c0_0 = arith.constant 0 : index
    %c0_1 = arith.constant 0 : index
    %0 = vector.load %arg2[%c0, %c0_0, %c0_1] : memref<1x8x32xf32, #tpu.memory_space<vmem>>, vector<1x8x32xf32>
    %1 = vector.shape_cast %0 : vector<1x8x32xf32> to vector<8x32xf32>
    %c0_2 = arith.constant 0 : index
    %c0_3 = arith.constant 0 : index
    %2 = vector.load %arg3[%c0_2, %c0_3] : memref<1x32xf32, #tpu.memory_space<vmem>>, vector<1x32xf32>
    %c0_4 = arith.constant 0 : index
    %c0_5 = arith.constant 0 : index
    %3 = vector.load %arg4[%c0_4, %c0_5] : memref<1x32xf32, #tpu.memory_space<vmem>>, vector<1x32xf32>
    %cst = arith.constant dense<0.000000e+00> : vector<8xf32>
    %4 = vector.multi_reduction <add>, %1, %cst [1] : vector<8x32xf32> to vector<8xf32>
    %5 = vector.shape_cast %4 : vector<8xf32> to vector<8x1xf32>
    %cst_6 = arith.constant 3.200000e+01 : f32
    %6 = vector.broadcast %cst_6 : f32 to vector<8x1xf32>
    %7 = arith.divf %5, %6 : vector<8x1xf32>
    %8 = vector.broadcast %7 : vector<8x1xf32> to vector<8x32xf32>
    %9 = arith.subf %1, %8 : vector<8x32xf32>
    %10 = arith.mulf %9, %9 : vector<8x32xf32>
    %cst_7 = arith.constant dense<0.000000e+00> : vector<8xf32>
    %11 = vector.multi_reduction <add>, %10, %cst_7 [1] : vector<8x32xf32> to vector<8xf32>
    %12 = vector.shape_cast %11 : vector<8xf32> to vector<8x1xf32>
    %cst_8 = arith.constant 3.200000e+01 : f32
    %13 = vector.broadcast %cst_8 : f32 to vector<8x1xf32>
    %14 = arith.divf %12, %13 : vector<8x1xf32>
    %cst_9 = arith.constant 9.99999974E-6 : f32
    %15 = vector.broadcast %cst_9 : f32 to vector<8x1xf32>
    %16 = arith.addf %14, %15 : vector<8x1xf32>
    %17 = math.rsqrt %16 : vector<8x1xf32>
    %18 = vector.broadcast %17 : vector<8x1xf32> to vector<8x32xf32>
    %19 = arith.mulf %9, %18 : vector<8x32xf32>
    %20 = vector.broadcast %2 : vector<1x32xf32> to vector<8x32xf32>
    %21 = arith.mulf %19, %20 : vector<8x32xf32>
    %22 = vector.broadcast %3 : vector<1x32xf32> to vector<8x32xf32>
    %23 = arith.addf %21, %22 : vector<8x32xf32>
    %c0_10 = arith.constant 0 : index
    %c0_11 = arith.constant 0 : index
    %24 = vector.load %arg5[%c0_10, %c0_11] : memref<32x64xbf16, #tpu.memory_space<vmem>>, vector<32x64xbf16>
    %25 = arith.truncf %23 : vector<8x32xf32> to vector<8x32xbf16>
    %cst_12 = arith.constant dense<0.000000e+00> : vector<8x64xf32>
    %26 = tpu.matmul %25, %24, %cst_12 {dimension_numbers = #tpu.dot_dimension_numbers<[1], [0], [0], [1], [0, 0, 1, 1], [], []>} : vector<8x32xbf16>, vector<32x64xbf16>, vector<8x64xf32> -> vector<8x64xf32>
    %c0_13 = arith.constant 0 : index
    %c0_14 = arith.constant 0 : index
    %27 = vector.load %arg6[%c0_13, %c0_14] : memref<1x64xf32, #tpu.memory_space<vmem>>, vector<1x64xf32>
    %28 = vector.broadcast %27 : vector<1x64xf32> to vector<8x64xf32>
    %29 = arith.addf %26, %28 : vector<8x64xf32>
    %30 = vector.extract_strided_slice %29 {offsets = [0, 0], sizes = [8, 32], strides = [1, 1]} : vector<8x64xf32> to vector<8x32xf32>
    %31 = vector.shape_cast %30 : vector<8x32xf32> to vector<8x4x8xf32>
    %32 = tpu.transpose %31, [1, 0, 2] : vector<8x4x8xf32> -> vector<4x8x8xf32>
    %33 = vector.extract_strided_slice %29 {offsets = [0, 32], sizes = [8, 32], strides = [1, 1]} : vector<8x64xf32> to vector<8x32xf32>
    %34 = vector.shape_cast %33 : vector<8x32xf32> to vector<8x4x8xf32>
    %35 = tpu.transpose %34, [1, 0, 2] : vector<8x4x8xf32> -> vector<4x8x8xf32>
    %36 = arith.truncf %32 : vector<4x8x8xf32> to vector<4x8x8xbf16>
    %c0_15 = arith.constant 0 : index
    %c0_16 = arith.constant 0 : index
    %c0_17 = arith.constant 0 : index
    %c0_18 = arith.constant 0 : index
    %37 = vector.load %arg7[%c0_15, %c0_16, %c0_17, %c0_18] : memref<1x4x8x8xbf16, #tpu.memory_space<vmem>>, vector<1x4x8x8xbf16>
    %38 = vector.shape_cast %37 : vector<1x4x8x8xbf16> to vector<4x8x8xbf16>
    %39 = vector.shape_cast %36 : vector<4x8x8xbf16> to vector<1x4x8x8xbf16>
    tpu.vector_store %arg7[%c0_15, %c0_16, %c0_17, %c0_18], %39 {strides = array<i32>} : memref<1x4x8x8xbf16, #tpu.memory_space<vmem>>, vector<1x4x8x8xbf16>,
    %40 = arith.truncf %35 : vector<4x8x8xf32> to vector<4x8x8xbf16>
    %c0_19 = arith.constant 0 : index
    %c0_20 = arith.constant 0 : index
    %c0_21 = arith.constant 0 : index
    %c0_22 = arith.constant 0 : index
    %41 = vector.load %arg8[%c0_19, %c0_20, %c0_21, %c0_22] : memref<1x4x8x8xbf16, #tpu.memory_space<vmem>>, vector<1x4x8x8xbf16>
    %42 = vector.shape_cast %41 : vector<1x4x8x8xbf16> to vector<4x8x8xbf16>
    %43 = vector.shape_cast %40 : vector<4x8x8xbf16> to vector<1x4x8x8xbf16>
    tpu.vector_store %arg8[%c0_19, %c0_20, %c0_21, %c0_22], %43 {strides = array<i32>} : memref<1x4x8x8xbf16, #tpu.memory_space<vmem>>, vector<1x4x8x8xbf16>,
    return
  }
  func.func @transform_0(%arg0: i32, %arg1: i32) -> (i32, i32, i32) {
    %c0_i32 = arith.constant 0 : i32
    %c0_i32_0 = arith.constant 0 : i32
    return %arg0, %arg1, %c0_i32 : i32, i32, i32
  }
  func.func @transform_1(%arg0: i32, %arg1: i32) -> (i32, i32) {
    %c0_i32 = arith.constant 0 : i32
    %c0_i32_0 = arith.constant 0 : i32
    %c0_i32_1 = arith.constant 0 : i32
    return %c0_i32, %c0_i32_0 : i32, i32
  }
  func.func @transform_2(%arg0: i32, %arg1: i32) -> (i32, i32) {
    %c0_i32 = arith.constant 0 : i32
    %c0_i32_0 = arith.constant 0 : i32
    %c0_i32_1 = arith.constant 0 : i32
    return %c0_i32, %c0_i32_0 : i32, i32
  }
  func.func @transform_3(%arg0: i32, %arg1: i32) -> (i32, i32) {
    %c0_i32 = arith.constant 0 : i32
    %c0_i32_0 = arith.constant 0 : i32
    %c0_i32_1 = arith.constant 0 : i32
    return %c0_i32, %c0_i32_0 : i32, i32
  }
  func.func @transform_4(%arg0: i32, %arg1: i32) -> (i32, i32) {
    %c0_i32 = arith.constant 0 : i32
    %c0_i32_0 = arith.constant 0 : i32
    %c0_i32_1 = arith.constant 0 : i32
    return %c0_i32, %c0_i32_0 : i32, i32
  }
  func.func @transform_5(%arg0: i32, %arg1: i32) -> (i32, i32, i32, i32) {
    %c0_i32 = arith.constant 0 : i32
    %c0_i32_0 = arith.constant 0 : i32
    %c0_i32_1 = arith.constant 0 : i32
    return %arg0, %c0_i32, %arg1, %c0_i32_0 : i32, i32, i32, i32
  }
  func.func @transform_6(%arg0: i32, %arg1: i32) -> (i32, i32, i32, i32) {
    %c0_i32 = arith.constant 0 : i32
    %c0_i32_0 = arith.constant 0 : i32
    %c0_i32_1 = arith.constant 0 : i32
    return %arg0, %c0_i32, %arg1, %c0_i32_0 : i32, i32, i32, i32
  }
}

</mosaic_0001>

<llo_original>
// kernel: tpu_custom_call.1
$region0: #{tpu_custom_call.1}
  #allocation0 [shape = 'u32[]', space=smem, size = 0x4, offset = 0x4, fixed_abs, tag = 'smem constant byte address 0x4 - core index']
  #allocation1 [shape = 'u32[144,128]{1,0:T(1,128)}', space=vmem, size = 0x12000, scoped, tag = 'internal scratch']
  %s0 = inlined_call_operand.hbm [shape: f32[2,8,32], index: 0, kind: input, shape index: {}]
  %s1 = inlined_call_operand.hbm [shape: f32[1,32], index: 1, kind: input, shape index: {}]
  %s2 = inlined_call_operand.hbm [shape: f32[1,32], index: 2, kind: input, shape index: {}]
  %s3 = inlined_call_operand.hbm [shape: bf16[32,64], index: 3, kind: input, shape index: {}]
  %s4 = inlined_call_operand.hbm [shape: f32[1,64], index: 4, kind: input, shape index: {}]
  %s5 = inlined_call_operand.hbm [shape: bf16[2,4,8,8], index: 5, kind: output, shape index: {0}]
  %s6 = inlined_call_operand.hbm [shape: bf16[2,4,8,8], index: 6, kind: output, shape index: {1}]
  %7 = xla_tuple %s5, %s6
  %s8 = sld [smem:[#allocation0]]
  $region81: #{tpu_custom_call.1} parent=0
    _
  %s10 = ssub.s32 1, %s8
  %s11 = scalar_select 0, %s10, %s8
  $region1: #{tpu_custom_call.1} parent=0
    #allocation2 [shape = 'u8[8192]{0}', space=vmem, size = 0x2000, scoped, tag = 'input window, operand 0']
    #allocation3 [shape = 's32[2]{0}', space=sflag, size = 0x8, scoped, tag = 'scoped memory for tpu_custom_call.1']
    #allocation4 [shape = 's32[2]{0}', space=sflag, size = 0x8, scoped, tag = 'scoped memory for tpu_custom_call.1']
    #allocation5 [shape = 'u8[512]{0}', space=vmem, size = 0x400, scoped, tag = 'input window, operand 1, single buffered']
    #allocation6 [shape = 's32[1]{0}', space=sflag, size = 0x4, scoped, tag = 'scoped memory for tpu_custom_call.1']
    #allocation7 [shape = 'u8[512]{0}', space=vmem, size = 0x400, scoped, tag = 'input window, operand 2, single buffered']
    #allocation8 [shape = 'u8[8192]{0}', space=vmem, size = 0x2000, scoped, tag = 'input window, operand 3, single buffered']
    #allocation9 [shape = 's32[1]{0}', space=sflag, size = 0x4, scoped, tag = 'scoped memory for tpu_custom_call.1']
    #allocation10 [shape = 'u8[512]{0}', space=vmem, size = 0x400, scoped, tag = 'input window, operand 4, single buffered']
    #allocation11 [shape = 'u8[16384]{0}', space=vmem, size = 0x4000, scoped, tag = 'output window, operand 0']
    #allocation12 [shape = 'u8[16384]{0}', space=vmem, size = 0x4000, scoped, tag = 'output window, operand 1']
    #allocation13 [shape = 's32[2]{0}', space=sflag, size = 0x8, scoped, tag = 'scoped memory for tpu_custom_call.1']
    %12 = vsyncpa [#allocation3], 0
    %s13 = scalar_lea.sflag [#allocation3], 1
    %14 = vsyncpa %s13, 0
    %15 = vsyncpa [#allocation6], 0
    %16 = vsyncpa [#allocation9], 0
    %17 = vsyncpa [#allocation4], 0
    %s18 = scalar_lea.sflag [#allocation4], 1
    %19 = vsyncpa %s18, 0
    %20 = vsyncpa [#allocation13], 0
    %s21 = scalar_lea.sflag [#allocation13], 1
    %22 = vsyncpa %s21, 0
    loop: start=0, step=1, limit=4
    $region2: #{tpu_custom_call.1} parent=1 // loop_pre_header
      _
    $region3: #{tpu_custom_call.1} parent=1 // loop_header
      %s24 = sphi 0, %s28
      %p25 = scmp.ge.s32.totalorder %s24, 4
      %s31 = sphi 0, %s43
      %s32 = sphi 0, %s39
      %s33 = sphi 0, %s31
      %s34 = sphi 0, %s32
      %s35 = sphi 0, %s33
      %s36 = sphi 0, %s34
      %s48 = sphi 0, %s50
      %s51 = sphi 0, %s48
      %s52 = sphi 0, %s51
      %s68 = sphi 0, %s52
      %s72 = sphi 0, %s72
      %s74 = sphi 0, %s72
      %s75 = sphi 0, %s74
      %s89 = sphi 0, %s75
      %s93 = sphi 0, %s93
      %s95 = sphi 0, %s93
      %s96 = sphi 0, %s95
      %s110 = sphi 0, %s96
      %s114 = sphi 0, %s114
      %s116 = sphi 0, %s114
      %s117 = sphi 0, %s116
      %s131 = sphi 0, %s117
      %s135 = sphi 0, %s135
      %s137 = sphi 0, %s135
      %s138 = sphi 0, %s137
      %s152 = sphi 0, %s138
      %s160 = sphi 0, %s162
      %s163 = sphi 0, %s160
      %s164 = sphi 0, %s163
      %s180 = sphi 0, %s164
      %s188 = sphi 0, %s190
      %s191 = sphi 0, %s188
      %s192 = sphi 0, %s191
      %s208 = sphi 0, %s192
    $region4: #{tpu_custom_call.1} parent=1 // loop_header_branch
      %27 = sbr.rel (%p25) target = $region8
    $region5: #{tpu_custom_call.1} parent=1 // loop_body
      %s29 = ssub.s32 %s24, 1
      %s30 = ssub.s32 %s24, 2
      %s37 = sadd.s32 1, %s32
      %p38 = scmp.ge.s32.totalorder %s37, 1
      %s39 = scalar_select %p38, 0, %s37
      %s40 = sadd.s32 1, %s31
      %s41 = scalar_select %p38, %s40, %s31
      %p42 = scmp.ge.s32.totalorder %s41, 2
      %s43 = scalar_select %p42, 0, %s41
      %s44 = ssub.s32 %s31, %s43
      %s45 = ssub.s32 %s32, %s39
      %s46 = sor.u32 %s44, %s45
      %p47 = scmp.eq.s32.totalorder %s46, 0
      %s49 = sadd.s32 %s48, 1
      %s50 = scalar_select %p47, %s48, %s49
      %p53 = pneg %p47
      %p54 = scmp.eq.s32.totalorder %s24, 1
      %p55 = por %p53, %p54
      %p56 = scmp.ne.s32.totalorder %s48, %s51
      %p57 = scmp.eq.s32.totalorder %s24, 0
      %p58 = por %p56, %p57
      %p59 = scmp.ne.s32.totalorder %s48, %s51
      %p60 = scmp.eq.s32.totalorder %s29, 1
      %p61 = por %p59, %p60
      %p62 = scmp.ne.s32.totalorder %s51, %s52
      %p63 = scmp.eq.s32.totalorder %s29, 0
      %p64 = por %p62, %p63
      %p65 = scmp.ne.s32.totalorder %s51, %s52
      %p66 = scmp.eq.s32.totalorder %s30, 1
      %p67 = por %p65, %p66
      %p69 = scmp.ne.s32.totalorder %s52, %s68
      %p70 = scmp.eq.s32.totalorder %s30, 0
      %p71 = por %p69, %p70
      %s73 = sadd.s32 %s72, 1
      %p76 = scmp.eq.s32.totalorder %s24, 1
      %p77 = scmp.ne.s32.totalorder %s72, %s74
      %p78 = scmp.eq.s32.totalorder %s24, 0
      %p79 = por %p77, %p78
      %p80 = scmp.ne.s32.totalorder %s72, %s74
      %p81 = scmp.eq.s32.totalorder %s29, 1
      %p82 = por %p80, %p81
      %p83 = scmp.ne.s32.totalorder %s74, %s75
      %p84 = scmp.eq.s32.totalorder %s29, 0
      %p85 = por %p83, %p84
      %p86 = scmp.ne.s32.totalorder %s74, %s75
      %p87 = scmp.eq.s32.totalorder %s30, 1
      %p88 = por %p86, %p87
      %p90 = scmp.ne.s32.totalorder %s75, %s89
      %p91 = scmp.eq.s32.totalorder %s30, 0
      %p92 = por %p90, %p91
      %s94 = sadd.s32 %s93, 1
      %p97 = scmp.eq.s32.totalorder %s24, 1
      %p98 = scmp.ne.s32.totalorder %s93, %s95
      %p99 = scmp.eq.s32.totalorder %s24, 0
      %p100 = por %p98, %p99
      %p101 = scmp.ne.s32.totalorder %s93, %s95
      %p102 = scmp.eq.s32.totalorder %s29, 1
      %p103 = por %p101, %p102
      %p104 = scmp.ne.s32.totalorder %s95, %s96
      %p105 = scmp.eq.s32.totalorder %s29, 0
      %p106 = por %p104, %p105
      %p107 = scmp.ne.s32.totalorder %s95, %s96
      %p108 = scmp.eq.s32.totalorder %s30, 1
      %p109 = por %p107, %p108
      %p111 = scmp.ne.s32.totalorder %s96, %s110
      %p112 = scmp.eq.s32.totalorder %s30, 0
      %p113 = por %p111, %p112
      %s115 = sadd.s32 %s114, 1
      %p118 = scmp.eq.s32.totalorder %s24, 1
      %p119 = scmp.ne.s32.totalorder %s114, %s116
      %p120 = scmp.eq.s32.totalorder %s24, 0
      %p121 = por %p119, %p120
      %p122 = scmp.ne.s32.totalorder %s114, %s116
      %p123 = scmp.eq.s32.totalorder %s29, 1
      %p124 = por %p122, %p123
      %p125 = scmp.ne.s32.totalorder %s116, %s117
      %p126 = scmp.eq.s32.totalorder %s29, 0
      %p127 = por %p125, %p126
      %p128 = scmp.ne.s32.totalorder %s116, %s117
      %p129 = scmp.eq.s32.totalorder %s30, 1
      %p130 = por %p128, %p129
      %p132 = scmp.ne.s32.totalorder %s117, %s131
      %p133 = scmp.eq.s32.totalorder %s30, 0
      %p134 = por %p132, %p133
      %s136 = sadd.s32 %s135, 1
      %p139 = scmp.eq.s32.totalorder %s24, 1
      %p140 = scmp.ne.s32.totalorder %s135, %s137
      %p141 = scmp.eq.s32.totalorder %s24, 0
      %p142 = por %p140, %p141
      %p143 = scmp.ne.s32.totalorder %s135, %s137
      %p144 = scmp.eq.s32.totalorder %s29, 1
      %p145 = por %p143, %p144
      %p146 = scmp.ne.s32.totalorder %s137, %s138
      %p147 = scmp.eq.s32.totalorder %s29, 0
      %p148 = por %p146, %p147
      %p149 = scmp.ne.s32.totalorder %s137, %s138
      %p150 = scmp.eq.s32.totalorder %s30, 1
      %p151 = por %p149, %p150
      %p153 = scmp.ne.s32.totalorder %s138, %s152
      %p154 = scmp.eq.s32.totalorder %s30, 0
      %p155 = por %p153, %p154
      %s156 = ssub.s32 %s31, %s43
      %s157 = ssub.s32 %s32, %s39
      %s158 = sor.u32 %s156, %s157
      %p159 = scmp.eq.s32.totalorder %s158, 0
      %s161 = sadd.s32 %s160, 1
      %s162 = scalar_select %p159, %s160, %s161
      %p165 = pneg %p159
      %p166 = scmp.eq.s32.totalorder %s24, 1
      %p167 = por %p165, %p166
      %p168 = scmp.ne.s32.totalorder %s160, %s163
      %p169 = scmp.eq.s32.totalorder %s24, 0
      %p170 = por %p168, %p169
      %p171 = scmp.ne.s32.totalorder %s160, %s163
      %p172 = scmp.eq.s32.totalorder %s29, 1
      %p173 = por %p171, %p172
      %p174 = scmp.ne.s32.totalorder %s163, %s164
      %p175 = scmp.eq.s32.totalorder %s29, 0
      %p176 = por %p174, %p175
      %p177 = scmp.ne.s32.totalorder %s163, %s164
      %p178 = scmp.eq.s32.totalorder %s30, 1
      %p179 = por %p177, %p178
      %p181 = scmp.ne.s32.totalorder %s164, %s180
      %p182 = scmp.eq.s32.totalorder %s30, 0
      %p183 = por %p181, %p182
      %s184 = ssub.s32 %s31, %s43
      %s185 = ssub.s32 %s32, %s39
      %s186 = sor.u32 %s184, %s185
      %p187 = scmp.eq.s32.totalorder %s186, 0
      %s189 = sadd.s32 %s188, 1
      %s190 = scalar_select %p187, %s188, %s189
      %p193 = pneg %p187
      %p194 = scmp.eq.s32.totalorder %s24, 1
      %p195 = por %p193, %p194
      %p196 = scmp.ne.s32.totalorder %s188, %s191
      %p197 = scmp.eq.s32.totalorder %s24, 0
      %p198 = por %p196, %p197
      %p199 = scmp.ne.s32.totalorder %s188, %s191
      %p200 = scmp.eq.s32.totalorder %s29, 1
      %p201 = por %p199, %p200
      %p202 = scmp.ne.s32.totalorder %s191, %s192
      %p203 = scmp.eq.s32.totalorder %s29, 0
      %p204 = por %p202, %p203
      %p205 = scmp.ne.s32.totalorder %s191, %s192
      %p206 = scmp.eq.s32.totalorder %s30, 1
      %p207 = por %p205, %p206
      %p209 = scmp.ne.s32.totalorder %s192, %s208
      %p210 = scmp.eq.s32.totalorder %s30, 0
      %p211 = por %p209, %p210
      %p212 = scmp.le.s32.totalorder 1, %s24
      %p213 = scmp.lt.s32.totalorder %s24, 3
      %p214 = pnand %p212, %p213
      %p215 = pneg %p214
      // Predicated region
      $region9: #{tpu_custom_call.1} parent=5 // pred_check
        _
      $region10: #{tpu_custom_call.1} parent=5 // pred_check_branch
        %217 = sbr.rel (%p214) target = $region12
      $region11: #{tpu_custom_call.1} parent=5 // pred_region
        %s218 = ssub.s32 %s24, 1
        // Predicated region
        $region13: #{tpu_custom_call.1} parent=11 // pred_check
          %p219 = pneg %p85
        $region14: #{tpu_custom_call.1} parent=11 // pred_check_branch
          %221 = sbr.rel (%p219) target = $region16
        $region15: #{tpu_custom_call.1} parent=11 // pred_region
          %s223 = ssub.s32 16, 16
          %224 = vsyncadd [#allocation6], %s223
          %s226 = sshll.u32 [#allocation5], 4
          %s227 = int_to_ptr.vmem [resolvable:$true] %s226
          %229 = dma.hbm_to_vmem [thread:$0]  %s1, 16, %s227, [#allocation6]
        $region16: #{tpu_custom_call.1} parent=11 // pred_fallthru
          _
        // Predicated region
        $region17: #{tpu_custom_call.1} parent=11 // pred_check
          %p230 = pneg %p106
        $region18: #{tpu_custom_call.1} parent=11 // pred_check_branch
          %232 = sbr.rel (%p230) target = $region20
        $region19: #{tpu_custom_call.1} parent=11 // pred_region
          %s234 = ssub.s32 16, 16
          %235 = vsyncadd [#allocation6], %s234
          %s237 = sshll.u32 [#allocation7], 4
          %s238 = int_to_ptr.vmem [resolvable:$true] %s237
          %240 = dma.hbm_to_vmem [thread:$0]  %s2, 16, %s238, [#allocation6]
        $region20: #{tpu_custom_call.1} parent=11 // pred_fallthru
          _
        // Predicated region
        $region21: #{tpu_custom_call.1} parent=11 // pred_check
          %p241 = pneg %p127
        $region22: #{tpu_custom_call.1} parent=11 // pred_check_branch
          %243 = sbr.rel (%p241) target = $region24
        $region23: #{tpu_custom_call.1} parent=11 // pred_region
          %s245 = ssub.s32 256, 256
          %246 = vsyncadd [#allocation9], %s245
          %s247 = sshll.u32 [#allocation8], 4
          %s248 = int_to_ptr.vmem [resolvable:$true] %s247
          %253 = dma.hbm_to_vmem [thread:$0]  %s3, 256, %s248, [#allocation9], 64, 64, 4
        $region24: #{tpu_custom_call.1} parent=11 // pred_fallthru
          _
        // Predicated region
        $region25: #{tpu_custom_call.1} parent=11 // pred_check
          %p254 = pneg %p148
        $region26: #{tpu_custom_call.1} parent=11 // pred_check_branch
          %256 = sbr.rel (%p254) target = $region28
        $region27: #{tpu_custom_call.1} parent=11 // pred_region
          %s258 = ssub.s32 16, 16
          %259 = vsyncadd [#allocation9], %s258
          %s261 = sshll.u32 [#allocation10], 4
          %s262 = int_to_ptr.vmem [resolvable:$true] %s261
          %264 = dma.hbm_to_vmem [thread:$0]  %s4, 16, %s262, [#allocation9]
        $region28: #{tpu_custom_call.1} parent=11 // pred_fallthru
          _
      $region12: #{tpu_custom_call.1} parent=5 // pred_fallthru
        _
      %p265 = scmp.lt.s32.totalorder %s24, 2
      // Predicated region
      $region29: #{tpu_custom_call.1} parent=5 // pred_check
        %p266 = pneg %p265
      $region30: #{tpu_custom_call.1} parent=5 // pred_check_branch
        %268 = sbr.rel (%p266) target = $region32
      $region31: #{tpu_custom_call.1} parent=5 // pred_region
        // Predicated region
        $region33: #{tpu_custom_call.1} parent=31 // pred_check
          %p269 = pneg %p58
        $region34: #{tpu_custom_call.1} parent=31 // pred_check_branch
          %271 = sbr.rel (%p269) target = $region36
        $region35: #{tpu_custom_call.1} parent=31 // pred_region
          %s272 = sand.u32 %s48, 1
          %s273 = scalar_lea.sflag [#allocation3], %s272
          %s274 = sand.u32 %s48, 1
          %s275 = smul.addr %s274, 8
          %s276 = scalar_lea.vmem [#allocation2], %s275
          %s278 = ssub.s32 128, 128
          %279 = vsyncadd %s273, %s278
          %s280 = sadd.s32 %s32, %s31
          %s281 = smul.addr %s280, 128
          %s282 = scalar_lea.hbm %s0, %s281
          %s284 = sshll.u32 %s276, 4
          %s285 = int_to_ptr.vmem [resolvable:$true] %s284
          %287 = dma.hbm_to_vmem [thread:$0]  %s282, 128, %s285, %s273
        $region36: #{tpu_custom_call.1} parent=31 // pred_fallthru
          _
      $region32: #{tpu_custom_call.1} parent=5 // pred_fallthru
        _
      %p288 = scmp.le.s32.totalorder 1, %s24
      %p289 = scmp.lt.s32.totalorder %s24, 3
      %p290 = pnand %p288, %p289
      %p291 = pneg %p290
      // Predicated region
      $region37: #{tpu_custom_call.1} parent=5 // pred_check
        _
      $region38: #{tpu_custom_call.1} parent=5 // pred_check_branch
        %293 = sbr.rel (%p290) target = $region40
      $region39: #{tpu_custom_call.1} parent=5 // pred_region
        %s294 = ssub.s32 %s24, 1
        %s295 = sand.u32 %s51, 1
        %s296 = scalar_lea.sflag [#allocation3], %s295
        %s297 = sand.u32 %s51, 1
        %s298 = smul.addr %s297, 8
        %s299 = scalar_lea.vmem [#allocation2], %s298
        // Predicated region
        $region41: #{tpu_custom_call.1} parent=39 // pred_check
          %p300 = pneg %p64
        $region42: #{tpu_custom_call.1} parent=39 // pred_check_branch
          %302 = sbr.rel (%p300) target = $region44
        $region43: #{tpu_custom_call.1} parent=39 // pred_region
          %303 = dma.done %s296, 128
        $region44: #{tpu_custom_call.1} parent=39 // pred_fallthru
          _
        // Predicated region
        $region45: #{tpu_custom_call.1} parent=39 // pred_check
          %p304 = pneg %p85
        $region46: #{tpu_custom_call.1} parent=39 // pred_check_branch
          %306 = sbr.rel (%p304) target = $region48
        $region47: #{tpu_custom_call.1} parent=39 // pred_region
          %307 = dma.done [#allocation6], 16
        $region48: #{tpu_custom_call.1} parent=39 // pred_fallthru
          _
        // Predicated region
        $region49: #{tpu_custom_call.1} parent=39 // pred_check
          %p308 = pneg %p106
        $region50: #{tpu_custom_call.1} parent=39 // pred_check_branch
          %310 = sbr.rel (%p308) target = $region52
        $region51: #{tpu_custom_call.1} parent=39 // pred_region
          %311 = dma.done [#allocation6], 16
        $region52: #{tpu_custom_call.1} parent=39 // pred_fallthru
          _
        // Predicated region
        $region53: #{tpu_custom_call.1} parent=39 // pred_check
          %p312 = pneg %p127
        $region54: #{tpu_custom_call.1} parent=39 // pred_check_branch
          %314 = sbr.rel (%p312) target = $region56
        $region55: #{tpu_custom_call.1} parent=39 // pred_region
          %315 = dma.done [#allocation9], 256
        $region56: #{tpu_custom_call.1} parent=39 // pred_fallthru
          _
        // Predicated region
        $region57: #{tpu_custom_call.1} parent=39 // pred_check
          %p316 = pneg %p148
        $region58: #{tpu_custom_call.1} parent=39 // pred_check_branch
          %318 = sbr.rel (%p316) target = $region60
        $region59: #{tpu_custom_call.1} parent=39 // pred_region
          %319 = dma.done [#allocation9], 16
        $region60: #{tpu_custom_call.1} parent=39 // pred_fallthru
          _
        %s320 = sand.u32 %s51, 1
        %s321 = scalar_lea.sflag [#allocation3], %s320
        %s322 = sand.u32 %s51, 1
        %s323 = smul.addr %s322, 8
        %s324 = scalar_lea.vmem [#allocation2], %s323
        %p325 = pneg %p64
        %p326 = pneg %p61
        %p327 = pneg %p85
        %p328 = pneg %p82
        %p329 = pneg %p106
        %p330 = pneg %p103
        %p331 = pneg %p127
        %p332 = pneg %p124
        %p333 = pneg %p148
        %p334 = pneg %p145
        %p335 = pneg %p176
        %p336 = pneg %p173
        %s337 = sand.u32 %s163, 1
        %s338 = scalar_lea.sflag [#allocation4], %s337
        %s339 = sand.u32 %s163, 1
        %s340 = smul.addr %s339, 16
        %s341 = scalar_lea.vmem [#allocation11], %s340
        %p342 = pneg %p204
        %p343 = pneg %p201
        %s344 = sand.u32 %s191, 1
        %s345 = scalar_lea.sflag [#allocation13], %s344
        %s346 = sand.u32 %s191, 1
        %s347 = smul.addr %s346, 16
        %s348 = scalar_lea.vmem [#allocation12], %s347
        %v350 = vld [vmem:[%s299] sm:$0xff]
        %v351 = vld [vmem:[#allocation5] sm:$0x1]
        %v352 = vld [vmem:[#allocation7] sm:$0x1]
        %vm353 = vcmask 261120
        %v354 = vsel %vm353, %v350, 0.0
        %355 = vadd.xlane.f32.xlu0 %v354
        %v356 = vpop.xlane.xlu0 %355
        %v357 = vrcp.pop 32.0
        %v358 = vmul.f32 %v356, %v357
        %v359 = vsub.f32 %v350, %v358
        %v360 = vmul.f32 %v359, %v359
        %v361 = vsel %vm353, %v360, 0.0
        %362 = vadd.xlane.f32.xlu0 %v361
        %v363 = vpop.xlane.xlu0 %362
        %v364 = vmul.f32 %v363, %v357
        %v365 = vadd.f32 %v364, 1e-05
        %v366 = vrsqrt.pop %v365
        %v367 = vmul.f32 %v359, %v366
        %v369 = vlaneseq
        %v370 = vshrl.u32 %v369, 7
        %v371 = vsub.s32 0, %v370
        %v372 = vrot.slane %v351, %v371
        %v374 = vmul.f32 %v367, %v372
        %v376 = vlaneseq
        %v377 = vshrl.u32 %v376, 7
        %v378 = vsub.s32 0, %v377
        %v379 = vrot.slane %v352, %v378
        %v381 = vadd.f32 %v374, %v379
        %v382 = vld [vmem:[#allocation8] sm:$0xf]
        %v383 = vld [vmem:[#allocation8 + $0x4] sm:$0xf]
        %v384 = vld [vmem:[#allocation8 + $0x8] sm:$0xf]
        %v385 = vld [vmem:[#allocation8 + $0xc] sm:$0xf]
        %v386 = vpack.c.bf16 %v381, %v381
        %v387 = vld [vmem:[#allocation10] sm:$0x1]
        %v389 = vlaneseq
        %v390 = vshrl.u32 %v389, 7
        %v391 = vsub.s32 0, %v390
        %v392 = vrot.slane %v387, %v391
        %v398 = vunpack.c.l.b16 %v382
        %v399 = vunpack.c.l.b16 %v383
        %v400 = vunpack.c.l.b16 %v384
        %v401 = vunpack.c.l.b16 %v385
        %v402 = vpack.c.b16 %v399, %v398
        %v403 = vpack.c.b16 %v401, %v400
        %v407 = vsel %vm353, %v386, 0
        %409 = vmatprep.subr.bf16.mxu0 0
        %410 = vmatpush1.bf16.msra.mxu0 %v402
        %411 = vmatprep.subr.bf16.mxu0 0
        %412 = vmatpush1.bf16.msra.mxu0 %v403
        %413 = vmatprep.subr.bf16.mxu0 0
        %414 = vmatpush1.bf16.msra.mxu0 0
        %415 = vmatprep.subr.bf16.mxu0 0
        %416 = vmatpush1.bf16.msra.mxu0 0
        %417 = vmatprep.subr.bf16.mxu0 0
        %418 = vmatpush1.bf16.msra.mxu0 0
        %419 = vmatprep.subr.bf16.mxu0 0
        %420 = vmatpush1.bf16.msra.mxu0 0
        %421 = vmatprep.subr.bf16.mxu0 0
        %422 = vmatpush1.bf16.msra.mxu0 0
        %423 = vmatprep.subr.bf16.mxu0 0
        %424 = vmatpush1.bf16.msra.mxu0 0
        %425 = vmatprep.subr.bf16.mxu0 0
        %426 = vmatpush1.bf16.msra.mxu0 0
        %427 = vmatprep.subr.bf16.mxu0 0
        %428 = vmatpush1.bf16.msra.mxu0 0
        %429 = vmatprep.subr.bf16.mxu0 0
        %430 = vmatpush1.bf16.msra.mxu0 0
        %431 = vmatprep.subr.bf16.mxu0 0
        %432 = vmatpush1.bf16.msra.mxu0 0
        %433 = vmatprep.subr.bf16.mxu0 0
        %434 = vmatpush1.bf16.msra.mxu0 0
        %435 = vmatprep.subr.bf16.mxu0 0
        %436 = vmatpush1.bf16.msra.mxu0 0
        %437 = vmatprep.subr.bf16.mxu0 0
        %438 = vmatpush1.bf16.msra.mxu0 0
        %439 = vmatprep.subr.bf16.mxu0 0
        %440 = vmatpush1.bf16.msra.mxu0 0
        %441 = vmatprep.mubr.bf16.mxu0 0
        %442 = vmatmul.mubr.bf16.gmra.mrb[0].mxu0 %v407
        %v443 = vpop.f32.mrb[0].mxu0
        %v444 = vadd.f32 %v392, %v443
        %v445 = vpop.f32.mrb[0].mxu0
        %v446 = vpop.f32.mrb[0].mxu0
        %v447 = vpop.f32.mrb[0].mxu0
        %448 = vdwg.mxu0
        %450 = vrot.lane.b32.xlu0 %v444, 120
        %v451 = vpop.permute.xlu0 %450
        %453 = vrot.lane.b32.xlu0 %v444, 112
        %v454 = vpop.permute.xlu0 %453
        %456 = vrot.lane.b32.xlu0 %v444, 104
        %v457 = vpop.permute.xlu0 %456
        %v459 = vcombine.low %v444, %v454
        %v460 = vcombine.high %v444, %v454
        %v462 = vunpack.c.l.s4 1983009808
        %v463 = vunpack.c.0.s8 %v462
        %v464 = vlaneseq
        %v465 = vshrl.u32 %v464, 7
        %v466 = vsub.s32 %v463, %v465
        %v467 = vrot.slane %v459, %v466
        %v469 = vunpack.c.l.s4 1983009808
        %v470 = vunpack.c.0.s8 %v469
        %v471 = vlaneseq
        %v472 = vshrl.u32 %v471, 7
        %v473 = vsub.s32 %v470, %v472
        %v474 = vrot.slane %v460, %v473
        %v475 = vcombine.low %v451, %v457
        %v476 = vcombine.high %v451, %v457
        %v478 = vunpack.c.l.s4 1983009808
        %v479 = vunpack.c.0.s8 %v478
        %v480 = vlaneseq
        %v481 = vshrl.u32 %v480, 7
        %v482 = vsub.s32 %v479, %v481
        %v483 = vrot.slane %v475, %v482
        %v485 = vunpack.c.l.s4 1983009808
        %v486 = vunpack.c.0.s8 %v485
        %v487 = vlaneseq
        %v488 = vshrl.u32 %v487, 7
        %v489 = vsub.s32 %v486, %v488
        %v490 = vrot.slane %v476, %v489
        %v491 = vcombine.low %v467, %v483
        %v492 = vcombine.high %v467, %v483
        %v494 = vunpack.c.l.s4 1934713408
        %v495 = vunpack.c.0.s8 %v494
        %v496 = vlaneseq
        %v497 = vshrl.u32 %v496, 7
        %v498 = vsub.s32 %v495, %v497
        %v499 = vrot.slane %v491, %v498
        %v501 = vunpack.c.l.s4 1934713408
        %v502 = vunpack.c.0.s8 %v501
        %v503 = vlaneseq
        %v504 = vshrl.u32 %v503, 7
        %v505 = vsub.s32 %v502, %v504
        %v506 = vrot.slane %v492, %v505
        %v507 = vcombine.low %v474, %v490
        %v508 = vcombine.high %v474, %v490
        %v510 = vunpack.c.l.s4 1934713408
        %v511 = vunpack.c.0.s8 %v510
        %v512 = vlaneseq
        %v513 = vshrl.u32 %v512, 7
        %v514 = vsub.s32 %v511, %v513
        %v515 = vrot.slane %v507, %v514
        %v517 = vunpack.c.l.s4 1934713408
        %v518 = vunpack.c.0.s8 %v517
        %v519 = vlaneseq
        %v520 = vshrl.u32 %v519, 7
        %v521 = vsub.s32 %v518, %v520
        %v522 = vrot.slane %v508, %v521
        %v523 = vcombine.high %v499, 0.0
        %v524 = vcombine.high %v506, 0.0
        %v525 = vcombine.high %v515, 0.0
        %v526 = vcombine.high %v522, 0.0
        %v527 = vcombine.low %v499, %v506
        %v529 = vunpack.c.l.s4 1983009808
        %v530 = vunpack.c.0.s8 %v529
        %v531 = vlaneseq
        %v532 = vshrl.u32 %v531, 7
        %v533 = vsub.s32 %v530, %v532
        %v534 = vrot.slane %v527, %v533
        %v535 = vcombine.low %v523, %v524
        %v537 = vunpack.c.l.s4 1983009808
        %v538 = vunpack.c.0.s8 %v537
        %v539 = vlaneseq
        %v540 = vshrl.u32 %v539, 7
        %v541 = vsub.s32 %v538, %v540
        %v542 = vrot.slane %v535, %v541
        %v543 = vcombine.low %v515, %v522
        %v545 = vunpack.c.l.s4 1983009808
        %v546 = vunpack.c.0.s8 %v545
        %v547 = vlaneseq
        %v548 = vshrl.u32 %v547, 7
        %v549 = vsub.s32 %v546, %v548
        %v550 = vrot.slane %v543, %v549
        %v551 = vcombine.low %v525, %v526
        %v553 = vunpack.c.l.s4 1983009808
        %v554 = vunpack.c.0.s8 %v553
        %v555 = vlaneseq
        %v556 = vshrl.u32 %v555, 7
        %v557 = vsub.s32 %v554, %v556
        %v558 = vrot.slane %v551, %v557
        %v559 = vcombine.low %v534, %v542
        %v560 = vcombine.high %v534, %v542
        %v562 = vunpack.c.l.s4 1934713408
        %v563 = vunpack.c.0.s8 %v562
        %v564 = vlaneseq
        %v565 = vshrl.u32 %v564, 7
        %v566 = vsub.s32 %v563, %v565
        %v567 = vrot.slane %v559, %v566
        %v569 = vunpack.c.l.s4 1934713408
        %v570 = vunpack.c.0.s8 %v569
        %v571 = vlaneseq
        %v572 = vshrl.u32 %v571, 7
        %v573 = vsub.s32 %v570, %v572
        %v574 = vrot.slane %v560, %v573
        %v575 = vcombine.low %v550, %v558
        %v576 = vcombine.high %v550, %v558
        %v578 = vunpack.c.l.s4 1934713408
        %v579 = vunpack.c.0.s8 %v578
        %v580 = vlaneseq
        %v581 = vshrl.u32 %v580, 7
        %v582 = vsub.s32 %v579, %v581
        %v583 = vrot.slane %v575, %v582
        %v585 = vunpack.c.l.s4 1934713408
        %v586 = vunpack.c.0.s8 %v585
        %v587 = vlaneseq
        %v588 = vshrl.u32 %v587, 7
        %v589 = vsub.s32 %v586, %v588
        %v590 = vrot.slane %v576, %v589
        %v591 = vcombine.low %v567, %v583
        %v592 = vcombine.high %v567, %v583
        %v593 = vcombine.low %v574, %v590
        %v594 = vcombine.high %v574, %v590
        %595 = vrot.lane.b32.xlu0 %v444, 96
        %v596 = vpop.permute.xlu0 %595
        %597 = vrot.lane.b32.xlu0 %v451, 96
        %v598 = vpop.permute.xlu0 %597
        %599 = vrot.lane.b32.xlu0 %v454, 96
        %v600 = vpop.permute.xlu0 %599
        %601 = vrot.lane.b32.xlu0 %v457, 96
        %v602 = vpop.permute.xlu0 %601
        %v607 = vcombine.low %v596, %v600
        %v608 = vcombine.high %v596, %v600
        %v610 = vunpack.c.l.s4 1983009808
        %v611 = vunpack.c.0.s8 %v610
        %v612 = vlaneseq
        %v613 = vshrl.u32 %v612, 7
        %v614 = vsub.s32 %v611, %v613
        %v615 = vrot.slane %v607, %v614
        %v617 = vunpack.c.l.s4 1983009808
        %v618 = vunpack.c.0.s8 %v617
        %v619 = vlaneseq
        %v620 = vshrl.u32 %v619, 7
        %v621 = vsub.s32 %v618, %v620
        %v622 = vrot.slane %v608, %v621
        %v623 = vcombine.low %v598, %v602
        %v624 = vcombine.high %v598, %v602
        %v626 = vunpack.c.l.s4 1983009808
        %v627 = vunpack.c.0.s8 %v626
        %v628 = vlaneseq
        %v629 = vshrl.u32 %v628, 7
        %v630 = vsub.s32 %v627, %v629
        %v631 = vrot.slane %v623, %v630
        %v633 = vunpack.c.l.s4 1983009808
        %v634 = vunpack.c.0.s8 %v633
        %v635 = vlaneseq
        %v636 = vshrl.u32 %v635, 7
        %v637 = vsub.s32 %v634, %v636
        %v638 = vrot.slane %v624, %v637
        %v639 = vcombine.low %v615, %v631
        %v640 = vcombine.high %v615, %v631
        %v642 = vunpack.c.l.s4 1934713408
        %v643 = vunpack.c.0.s8 %v642
        %v644 = vlaneseq
        %v645 = vshrl.u32 %v644, 7
        %v646 = vsub.s32 %v643, %v645
        %v647 = vrot.slane %v639, %v646
        %v649 = vunpack.c.l.s4 1934713408
        %v650 = vunpack.c.0.s8 %v649
        %v651 = vlaneseq
        %v652 = vshrl.u32 %v651, 7
        %v653 = vsub.s32 %v650, %v652
        %v654 = vrot.slane %v640, %v653
        %v655 = vcombine.low %v622, %v638
        %v656 = vcombine.high %v622, %v638
        %v658 = vunpack.c.l.s4 1934713408
        %v659 = vunpack.c.0.s8 %v658
        %v660 = vlaneseq
        %v661 = vshrl.u32 %v660, 7
        %v662 = vsub.s32 %v659, %v661
        %v663 = vrot.slane %v655, %v662
        %v665 = vunpack.c.l.s4 1934713408
        %v666 = vunpack.c.0.s8 %v665
        %v667 = vlaneseq
        %v668 = vshrl.u32 %v667, 7
        %v669 = vsub.s32 %v666, %v668
        %v670 = vrot.slane %v656, %v669
        %v671 = vcombine.high %v647, 0.0
        %v672 = vcombine.high %v654, 0.0
        %v673 = vcombine.high %v663, 0.0
        %v674 = vcombine.high %v670, 0.0
        %v675 = vcombine.low %v647, %v654
        %v677 = vunpack.c.l.s4 1983009808
        %v678 = vunpack.c.0.s8 %v677
        %v679 = vlaneseq
        %v680 = vshrl.u32 %v679, 7
        %v681 = vsub.s32 %v678, %v680
        %v682 = vrot.slane %v675, %v681
        %v683 = vcombine.low %v671, %v672
        %v685 = vunpack.c.l.s4 1983009808
        %v686 = vunpack.c.0.s8 %v685
        %v687 = vlaneseq
        %v688 = vshrl.u32 %v687, 7
        %v689 = vsub.s32 %v686, %v688
        %v690 = vrot.slane %v683, %v689
        %v691 = vcombine.low %v663, %v670
        %v693 = vunpack.c.l.s4 1983009808
        %v694 = vunpack.c.0.s8 %v693
        %v695 = vlaneseq
        %v696 = vshrl.u32 %v695, 7
        %v697 = vsub.s32 %v694, %v696
        %v698 = vrot.slane %v691, %v697
        %v699 = vcombine.low %v673, %v674
        %v701 = vunpack.c.l.s4 1983009808
        %v702 = vunpack.c.0.s8 %v701
        %v703 = vlaneseq
        %v704 = vshrl.u32 %v703, 7
        %v705 = vsub.s32 %v702, %v704
        %v706 = vrot.slane %v699, %v705
        %v707 = vcombine.low %v682, %v690
        %v708 = vcombine.high %v682, %v690
        %v710 = vunpack.c.l.s4 1934713408
        %v711 = vunpack.c.0.s8 %v710
        %v712 = vlaneseq
        %v713 = vshrl.u32 %v712, 7
        %v714 = vsub.s32 %v711, %v713
        %v715 = vrot.slane %v707, %v714
        %v717 = vunpack.c.l.s4 1934713408
        %v718 = vunpack.c.0.s8 %v717
        %v719 = vlaneseq
        %v720 = vshrl.u32 %v719, 7
        %v721 = vsub.s32 %v718, %v720
        %v722 = vrot.slane %v708, %v721
        %v723 = vcombine.low %v698, %v706
        %v724 = vcombine.high %v698, %v706
        %v726 = vunpack.c.l.s4 1934713408
        %v727 = vunpack.c.0.s8 %v726
        %v728 = vlaneseq
        %v729 = vshrl.u32 %v728, 7
        %v730 = vsub.s32 %v727, %v729
        %v731 = vrot.slane %v723, %v730
        %v733 = vunpack.c.l.s4 1934713408
        %v734 = vunpack.c.0.s8 %v733
        %v735 = vlaneseq
        %v736 = vshrl.u32 %v735, 7
        %v737 = vsub.s32 %v734, %v736
        %v738 = vrot.slane %v724, %v737
        %v739 = vcombine.low %v715, %v731
        %v740 = vcombine.high %v715, %v731
        %v741 = vcombine.low %v722, %v738
        %v742 = vcombine.high %v722, %v738
        %v743 = vpack.c.bf16 %v591, %v591
        %v744 = vpack.c.bf16 %v592, %v592
        %v745 = vpack.c.bf16 %v593, %v593
        %v746 = vpack.c.bf16 %v594, %v594
        %vm747 = vcmask 60416
        %748 = vst.msk [vmem:[%s341] sm:$0xf] %vm747, %v743
        %749 = vst.msk [vmem:[%s341 + $0x4] sm:$0xf] %vm747, %v744
        %750 = vst.msk [vmem:[%s341 + $0x8] sm:$0xf] %vm747, %v745
        %751 = vst.msk [vmem:[%s341 + $0xc] sm:$0xf] %vm747, %v746
        %v752 = vpack.c.bf16 %v739, %v739
        %v753 = vpack.c.bf16 %v740, %v740
        %v754 = vpack.c.bf16 %v741, %v741
        %v755 = vpack.c.bf16 %v742, %v742
        %756 = vst.msk [vmem:[%s348] sm:$0xf] %vm747, %v752
        %757 = vst.msk [vmem:[%s348 + $0x4] sm:$0xf] %vm747, %v753
        %758 = vst.msk [vmem:[%s348 + $0x8] sm:$0xf] %vm747, %v754
        %759 = vst.msk [vmem:[%s348 + $0xc] sm:$0xf] %vm747, %v755
        %s760 = sand.u32 %s163, 1
        %s761 = scalar_lea.sflag [#allocation4], %s760
        %s762 = sand.u32 %s163, 1
        %s763 = smul.addr %s762, 16
        %s764 = scalar_lea.vmem [#allocation11], %s763
        %s765 = sand.u32 %s191, 1
        %s766 = scalar_lea.sflag [#allocation13], %s765
        %s767 = sand.u32 %s191, 1
        %s768 = smul.addr %s767, 16
        %s769 = scalar_lea.vmem [#allocation12], %s768
        // Predicated region
        $region61: #{tpu_custom_call.1} parent=39 // pred_check
          %p770 = pneg %p173
        $region62: #{tpu_custom_call.1} parent=39 // pred_check_branch
          %772 = sbr.rel (%p770) target = $region64
        $region63: #{tpu_custom_call.1} parent=39 // pred_region
          %s774 = ssub.s32 256, 256
          %775 = vsyncadd %s761, %s774
          %s776 = smul.addr %s33, 4
          %s777 = sadd.s32 %s34, %s776
          %s778 = smul.addr %s777, 64
          %s779 = scalar_lea.hbm %s5, %s778
          %s780 = sshll.u32 %s764, 4
          %s781 = int_to_ptr.vmem [resolvable:$true] %s780
          %786 = dma.vmem_to_hbm [thread:$0]  %s781, 256, %s779, %s761, 64, 64, 4
        $region64: #{tpu_custom_call.1} parent=39 // pred_fallthru
          _
        // Predicated region
        $region65: #{tpu_custom_call.1} parent=39 // pred_check
          %p787 = pneg %p201
        $region66: #{tpu_custom_call.1} parent=39 // pred_check_branch
          %789 = sbr.rel (%p787) target = $region68
        $region67: #{tpu_custom_call.1} parent=39 // pred_region
          %s791 = ssub.s32 256, 256
          %792 = vsyncadd %s766, %s791
          %s793 = smul.addr %s33, 4
          %s794 = sadd.s32 %s34, %s793
          %s795 = smul.addr %s794, 64
          %s796 = scalar_lea.hbm %s6, %s795
          %s797 = sshll.u32 %s769, 4
          %s798 = int_to_ptr.vmem [resolvable:$true] %s797
          %803 = dma.vmem_to_hbm [thread:$0]  %s798, 256, %s796, %s766, 64, 64, 4
        $region68: #{tpu_custom_call.1} parent=39 // pred_fallthru
          _
      $region40: #{tpu_custom_call.1} parent=5 // pred_fallthru
        _
      %p804 = scmp.le.s32.totalorder 2, %s24
      // Predicated region
      $region69: #{tpu_custom_call.1} parent=5 // pred_check
        %p805 = pneg %p804
      $region70: #{tpu_custom_call.1} parent=5 // pred_check_branch
        %807 = sbr.rel (%p805) target = $region72
      $region71: #{tpu_custom_call.1} parent=5 // pred_region
        %s808 = ssub.s32 %s24, 2
        // Predicated region
        $region73: #{tpu_custom_call.1} parent=71 // pred_check
          %p809 = pneg %p179
        $region74: #{tpu_custom_call.1} parent=71 // pred_check_branch
          %811 = sbr.rel (%p809) target = $region76
        $region75: #{tpu_custom_call.1} parent=71 // pred_region
          %s812 = sand.u32 %s164, 1
          %s813 = scalar_lea.sflag [#allocation4], %s812
          %s814 = sand.u32 %s164, 1
          %s815 = smul.addr %s814, 16
          %s816 = scalar_lea.vmem [#allocation11], %s815
          %817 = dma.done %s813, 256
        $region76: #{tpu_custom_call.1} parent=71 // pred_fallthru
          _
        // Predicated region
        $region77: #{tpu_custom_call.1} parent=71 // pred_check
          %p818 = pneg %p207
        $region78: #{tpu_custom_call.1} parent=71 // pred_check_branch
          %820 = sbr.rel (%p818) target = $region80
        $region79: #{tpu_custom_call.1} parent=71 // pred_region
          %s821 = sand.u32 %s192, 1
          %s822 = scalar_lea.sflag [#allocation13], %s821
          %s823 = sand.u32 %s192, 1
          %s824 = smul.addr %s823, 16
          %s825 = scalar_lea.vmem [#allocation12], %s824
          %826 = dma.done %s822, 256
        $region80: #{tpu_custom_call.1} parent=71 // pred_fallthru
          _
      $region72: #{tpu_custom_call.1} parent=5 // pred_fallthru
        _
    $region6: #{tpu_custom_call.1} parent=1 // loop_footer
      %s28 = sadd.s32 1, %s24
    $region7: #{tpu_custom_call.1} parent=1 // loop_footer_branch
      %23 = sbr.rel target = $region3
    $region8: #{tpu_custom_call.1} parent=1 // loop_exit
      _
    %827 = vsyncpa [#allocation3], 1
    %s828 = scalar_lea.sflag [#allocation3], 1
    %829 = vsyncpa %s828, 1
    %830 = vsyncpa [#allocation6], 1
    %831 = vsyncpa [#allocation9], 1
    %832 = vsyncpa [#allocation4], 1
    %s833 = scalar_lea.sflag [#allocation4], 1
    %834 = vsyncpa %s833, 1
    %835 = vsyncpa [#allocation13], 1
    %s836 = scalar_lea.sflag [#allocation13], 1
    %837 = vsyncpa %s836, 1

// kernel: tpu_custom_call.1
$region0: #{tpu_custom_call.1}
  #allocation0 [shape = 'u32[]', space=smem, size = 0x4, offset = 0x4, fixed_abs, tag = 'smem constant byte address 0x4 - core index']
  #allocation1 [shape = 'u32[144,128]{1,0:T(1,128)}', space=vmem, size = 0x12000, scoped, tag = 'internal scratch']
  %s0 = inlined_call_operand.hbm [shape: f32[2,8,32], index: 0, kind: input, shape index: {}]
  %s1 = inlined_call_operand.hbm [shape: f32[1,32], index: 1, kind: input, shape index: {}]
  %s2 = inlined_call_operand.hbm [shape: f32[1,32], index: 2, kind: input, shape index: {}]
  %s3 = inlined_call_operand.hbm [shape: bf16[32,64], index: 3, kind: input, shape index: {}]
  %s4 = inlined_call_operand.hbm [shape: f32[1,64], index: 4, kind: input, shape index: {}]
  %s5 = inlined_call_operand.hbm [shape: bf16[2,4,8,8], index: 5, kind: output, shape index: {0}]
  %s6 = inlined_call_operand.hbm [shape: bf16[2,4,8,8], index: 6, kind: output, shape index: {1}]
  %7 = xla_tuple %s5, %s6
  %s8 = sld [smem:[#allocation0]]
  $region81: #{tpu_custom_call.1} parent=0
    _
  %s10 = ssub.s32 1, %s8
  %s11 = scalar_select 0, %s10, %s8
  $region1: #{tpu_custom_call.1} parent=0
    #allocation2 [shape = 'u8[8192]{0}', space=vmem, size = 0x2000, scoped, tag = 'input window, operand 0']
    #allocation3 [shape = 's32[2]{0}', space=sflag, size = 0x8, scoped, tag = 'scoped memory for tpu_custom_call.1']
    #allocation4 [shape = 's32[2]{0}', space=sflag, size = 0x8, scoped, tag = 'scoped memory for tpu_custom_call.1']
    #allocation5 [shape = 'u8[512]{0}', space=vmem, size = 0x400, scoped, tag = 'input window, operand 1, single buffered']
    #allocation6 [shape = 's32[1]{0}', space=sflag, size = 0x4, scoped, tag = 'scoped memory for tpu_custom_call.1']
    #allocation7 [shape = 'u8[512]{0}', space=vmem, size = 0x400, scoped, tag = 'input window, operand 2, single buffered']
    #allocation8 [shape = 'u8[8192]{0}', space=vmem, size = 0x2000, scoped, tag = 'input window, operand 3, single buffered']
    #allocation9 [shape = 's32[1]{0}', space=sflag, size = 0x4, scoped, tag = 'scoped memory for tpu_custom_call.1']
    #allocation10 [shape = 'u8[512]{0}', space=vmem, size = 0x400, scoped, tag = 'input window, operand 4, single buffered']
    #allocation11 [shape = 'u8[16384]{0}', space=vmem, size = 0x4000, scoped, tag = 'output window, operand 0']
    #allocation12 [shape = 'u8[16384]{0}', space=vmem, size = 0x4000, scoped, tag = 'output window, operand 1']
    #allocation13 [shape = 's32[2]{0}', space=sflag, size = 0x8, scoped, tag = 'scoped memory for tpu_custom_call.1']
    %12 = vsyncpa [#allocation3], 0
    %s13 = scalar_lea.sflag [#allocation3], 1
    %14 = vsyncpa %s13, 0
    %15 = vsyncpa [#allocation6], 0
    %16 = vsyncpa [#allocation9], 0
    %17 = vsyncpa [#allocation4], 0
    %s18 = scalar_lea.sflag [#allocation4], 1
    %19 = vsyncpa %s18, 0
    %20 = vsyncpa [#allocation13], 0
    %s21 = scalar_lea.sflag [#allocation13], 1
    %22 = vsyncpa %s21, 0
    loop: start=0, step=1, limit=4
    $region2: #{tpu_custom_call.1} parent=1 // loop_pre_header
      _
    $region3: #{tpu_custom_call.1} parent=1 // loop_header
      %s24 = sphi 0, %s28
      %p25 = scmp.ge.s32.totalorder %s24, 4
      %s31 = sphi 0, %s43
      %s32 = sphi 0, %s39
      %s33 = sphi 0, %s31
      %s34 = sphi 0, %s32
      %s35 = sphi 0, %s33
      %s36 = sphi 0, %s34
      %s48 = sphi 0, %s50
      %s51 = sphi 0, %s48
      %s52 = sphi 0, %s51
      %s68 = sphi 0, %s52
      %s72 = sphi 0, %s72
      %s74 = sphi 0, %s72
      %s75 = sphi 0, %s74
      %s89 = sphi 0, %s75
      %s93 = sphi 0, %s93
      %s95 = sphi 0, %s93
      %s96 = sphi 0, %s95
      %s110 = sphi 0, %s96
      %s114 = sphi 0, %s114
      %s116 = sphi 0, %s114
      %s117 = sphi 0, %s116
      %s131 = sphi 0, %s117
      %s135 = sphi 0, %s135
      %s137 = sphi 0, %s135
      %s138 = sphi 0, %s137
      %s152 = sphi 0, %s138
      %s160 = sphi 0, %s162
      %s163 = sphi 0, %s160
      %s164 = sphi 0, %s163
      %s180 = sphi 0, %s164
      %s188 = sphi 0, %s190
      %s191 = sphi 0, %s188
      %s192 = sphi 0, %s191
      %s208 = sphi 0, %s192
    $region4: #{tpu_custom_call.1} parent=1 // loop_header_branch
      %27 = sbr.rel (%p25) target = $region8
    $region5: #{tpu_custom_call.1} parent=1 // loop_body
      %s29 = ssub.s32 %s24, 1
      %s30 = ssub.s32 %s24, 2
      %s37 = sadd.s32 1, %s32
      %p38 = scmp.ge.s32.totalorder %s37, 1
      %s39 = scalar_select %p38, 0, %s37
      %s40 = sadd.s32 1, %s31
      %s41 = scalar_select %p38, %s40, %s31
      %p42 = scmp.ge.s32.totalorder %s41, 2
      %s43 = scalar_select %p42, 0, %s41
      %s44 = ssub.s32 %s31, %s43
      %s45 = ssub.s32 %s32, %s39
      %s46 = sor.u32 %s44, %s45
      %p47 = scmp.eq.s32.totalorder %s46, 0
      %s49 = sadd.s32 %s48, 1
      %s50 = scalar_select %p47, %s48, %s49
      %p53 = pneg %p47
      %p54 = scmp.eq.s32.totalorder %s24, 1
      %p55 = por %p53, %p54
      %p56 = scmp.ne.s32.totalorder %s48, %s51
      %p57 = scmp.eq.s32.totalorder %s24, 0
      %p58 = por %p56, %p57
      %p59 = scmp.ne.s32.totalorder %s48, %s51
      %p60 = scmp.eq.s32.totalorder %s29, 1
      %p61 = por %p59, %p60
      %p62 = scmp.ne.s32.totalorder %s51, %s52
      %p63 = scmp.eq.s32.totalorder %s29, 0
      %p64 = por %p62, %p63
      %p65 = scmp.ne.s32.totalorder %s51, %s52
      %p66 = scmp.eq.s32.totalorder %s30, 1
      %p67 = por %p65, %p66
      %p69 = scmp.ne.s32.totalorder %s52, %s68
      %p70 = scmp.eq.s32.totalorder %s30, 0
      %p71 = por %p69, %p70
      %s73 = sadd.s32 %s72, 1
      %p76 = scmp.eq.s32.totalorder %s24, 1
      %p77 = scmp.ne.s32.totalorder %s72, %s74
      %p78 = scmp.eq.s32.totalorder %s24, 0
      %p79 = por %p77, %p78
      %p80 = scmp.ne.s32.totalorder %s72, %s74
      %p81 = scmp.eq.s32.totalorder %s29, 1
      %p82 = por %p80, %p81
      %p83 = scmp.ne.s32.totalorder %s74, %s75
      %p84 = scmp.eq.s32.totalorder %s29, 0
      %p85 = por %p83, %p84
      %p86 = scmp.ne.s32.totalorder %s74, %s75
      %p87 = scmp.eq.s32.totalorder %s30, 1
      %p88 = por %p86, %p87
      %p90 = scmp.ne.s32.totalorder %s75, %s89
      %p91 = scmp.eq.s32.totalorder %s30, 0
      %p92 = por %p90, %p91
      %s94 = sadd.s32 %s93, 1
      %p97 = scmp.eq.s32.totalorder %s24, 1
      %p98 = scmp.ne.s32.totalorder %s93, %s95
      %p99 = scmp.eq.s32.totalorder %s24, 0
      %p100 = por %p98, %p99
      %p101 = scmp.ne.s32.totalorder %s93, %s95
      %p102 = scmp.eq.s32.totalorder %s29, 1
      %p103 = por %p101, %p102
      %p104 = scmp.ne.s32.totalorder %s95, %s96
      %p105 = scmp.eq.s32.totalorder %s29, 0
      %p106 = por %p104, %p105
      %p107 = scmp.ne.s32.totalorder %s95, %s96
      %p108 = scmp.eq.s32.totalorder %s30, 1
      %p109 = por %p107, %p108
      %p111 = scmp.ne.s32.totalorder %s96, %s110
      %p112 = scmp.eq.s32.totalorder %s30, 0
      %p113 = por %p111, %p112
      %s115 = sadd.s32 %s114, 1
      %p118 = scmp.eq.s32.totalorder %s24, 1
      %p119 = scmp.ne.s32.totalorder %s114, %s116
      %p120 = scmp.eq.s32.totalorder %s24, 0
      %p121 = por %p119, %p120
      %p122 = scmp.ne.s32.totalorder %s114, %s116
      %p123 = scmp.eq.s32.totalorder %s29, 1
      %p124 = por %p122, %p123
      %p125 = scmp.ne.s32.totalorder %s116, %s117
      %p126 = scmp.eq.s32.totalorder %s29, 0
      %p127 = por %p125, %p126
      %p128 = scmp.ne.s32.totalorder %s116, %s117
      %p129 = scmp.eq.s32.totalorder %s30, 1
      %p130 = por %p128, %p129
      %p132 = scmp.ne.s32.totalorder %s117, %s131
      %p133 = scmp.eq.s32.totalorder %s30, 0
      %p134 = por %p132, %p133
      %s136 = sadd.s32 %s135, 1
      %p139 = scmp.eq.s32.totalorder %s24, 1
      %p140 = scmp.ne.s32.totalorder %s135, %s137
      %p141 = scmp.eq.s32.totalorder %s24, 0
      %p142 = por %p140, %p141
      %p143 = scmp.ne.s32.totalorder %s135, %s137
      %p144 = scmp.eq.s32.totalorder %s29, 1
      %p145 = por %p143, %p144
      %p146 = scmp.ne.s32.totalorder %s137, %s138
      %p147 = scmp.eq.s32.totalorder %s29, 0
      %p148 = por %p146, %p147
      %p149 = scmp.ne.s32.totalorder %s137, %s138
      %p150 = scmp.eq.s32.totalorder %s30, 1
      %p151 = por %p149, %p150
      %p153 = scmp.ne.s32.totalorder %s138, %s152
      %p154 = scmp.eq.s32.totalorder %s30, 0
      %p155 = por %p153, %p154
      %s156 = ssub.s32 %s31, %s43
      %s157 = ssub.s32 %s32, %s39
      %s158 = sor.u32 %s156, %s157
      %p159 = scmp.eq.s32.totalorder %s158, 0
      %s161 = sadd.s32 %s160, 1
      %s162 = scalar_select %p159, %s160, %s161
      %p165 = pneg %p159
      %p166 = scmp.eq.s32.totalorder %s24, 1
      %p167 = por %p165, %p166
      %p168 = scmp.ne.s32.totalorder %s160, %s163
      %p169 = scmp.eq.s32.totalorder %s24, 0
      %p170 = por %p168, %p169
      %p171 = scmp.ne.s32.totalorder %s160, %s163
      %p172 = scmp.eq.s32.totalorder %s29, 1
      %p173 = por %p171, %p172
      %p174 = scmp.ne.s32.totalorder %s163, %s164
      %p175 = scmp.eq.s32.totalorder %s29, 0
      %p176 = por %p174, %p175
      %p177 = scmp.ne.s32.totalorder %s163, %s164
      %p178 = scmp.eq.s32.totalorder %s30, 1
      %p179 = por %p177, %p178
      %p181 = scmp.ne.s32.totalorder %s164, %s180
      %p182 = scmp.eq.s32.totalorder %s30, 0
      %p183 = por %p181, %p182
      %s184 = ssub.s32 %s31, %s43
      %s185 = ssub.s32 %s32, %s39
      %s186 = sor.u32 %s184, %s185
      %p187 = scmp.eq.s32.totalorder %s186, 0
      %s189 = sadd.s32 %s188, 1
      %s190 = scalar_select %p187, %s188, %s189
      %p193 = pneg %p187
      %p194 = scmp.eq.s32.totalorder %s24, 1
      %p195 = por %p193, %p194
      %p196 = scmp.ne.s32.totalorder %s188, %s191
      %p197 = scmp.eq.s32.totalorder %s24, 0
      %p198 = por %p196, %p197
      %p199 = scmp.ne.s32.totalorder %s188, %s191
      %p200 = scmp.eq.s32.totalorder %s29, 1
      %p201 = por %p199, %p200
      %p202 = scmp.ne.s32.totalorder %s191, %s192
      %p203 = scmp.eq.s32.totalorder %s29, 0
      %p204 = por %p202, %p203
      %p205 = scmp.ne.s32.totalorder %s191, %s192
      %p206 = scmp.eq.s32.totalorder %s30, 1
      %p207 = por %p205, %p206
      %p209 = scmp.ne.s32.totalorder %s192, %s208
      %p210 = scmp.eq.s32.totalorder %s30, 0
      %p211 = por %p209, %p210
      %p212 = scmp.le.s32.totalorder 1, %s24
      %p213 = scmp.lt.s32.totalorder %s24, 3
      %p214 = pnand %p212, %p213
      %p215 = pneg %p214
      // Predicated region
      $region9: #{tpu_custom_call.1} parent=5 // pred_check
        _
      $region10: #{tpu_custom_call.1} parent=5 // pred_check_branch
        %217 = sbr.rel (%p214) target = $region12
      $region11: #{tpu_custom_call.1} parent=5 // pred_region
        %s218 = ssub.s32 %s24, 1
        // Predicated region
        $region13: #{tpu_custom_call.1} parent=11 // pred_check
          %p219 = pneg %p85
        $region14: #{tpu_custom_call.1} parent=11 // pred_check_branch
          %221 = sbr.rel (%p219) target = $region16
        $region15: #{tpu_custom_call.1} parent=11 // pred_region
          %s223 = ssub.s32 16, 16
          %224 = vsyncadd [#allocation6], %s223
          %s226 = sshll.u32 [#allocation5], 4
          %s227 = int_to_ptr.vmem [resolvable:$true] %s226
          %229 = dma.hbm_to_vmem [thread:$0]  %s1, 16, %s227, [#allocation6]
        $region16: #{tpu_custom_call.1} parent=11 // pred_fallthru
          _
        // Predicated region
        $region17: #{tpu_custom_call.1} parent=11 // pred_check
          %p230 = pneg %p106
        $region18: #{tpu_custom_call.1} parent=11 // pred_check_branch
          %232 = sbr.rel (%p230) target = $region20
        $region19: #{tpu_custom_call.1} parent=11 // pred_region
          %s234 = ssub.s32 16, 16
          %235 = vsyncadd [#allocation6], %s234
          %s237 = sshll.u32 [#allocation7], 4
          %s238 = int_to_ptr.vmem [resolvable:$true] %s237
          %240 = dma.hbm_to_vmem [thread:$0]  %s2, 16, %s238, [#allocation6]
        $region20: #{tpu_custom_call.1} parent=11 // pred_fallthru
          _
        // Predicated region
        $region21: #{tpu_custom_call.1} parent=11 // pred_check
          %p241 = pneg %p127
        $region22: #{tpu_custom_call.1} parent=11 // pred_check_branch
          %243 = sbr.rel (%p241) target = $region24
        $region23: #{tpu_custom_call.1} parent=11 // pred_region
          %s245 = ssub.s32 256, 256
          %246 = vsyncadd [#allocation9], %s245
          %s247 = sshll.u32 [#allocation8], 4
          %s248 = int_to_ptr.vmem [resolvable:$true] %s247
          %253 = dma.hbm_to_vmem [thread:$0]  %s3, 256, %s248, [#allocation9], 64, 64, 4
        $region24: #{tpu_custom_call.1} parent=11 // pred_fallthru
          _
        // Predicated region
        $region25: #{tpu_custom_call.1} parent=11 // pred_check
          %p254 = pneg %p148
        $region26: #{tpu_custom_call.1} parent=11 // pred_check_branch
          %256 = sbr.rel (%p254) target = $region28
        $region27: #{tpu_custom_call.1} parent=11 // pred_region
          %s258 = ssub.s32 16, 16
          %259 = vsyncadd [#allocation9], %s258
          %s261 = sshll.u32 [#allocation10], 4
          %s262 = int_to_ptr.vmem [resolvable:$true] %s261
          %264 = dma.hbm_to_vmem [thread:$0]  %s4, 16, %s262, [#allocation9]
        $region28: #{tpu_custom_call.1} parent=11 // pred_fallthru
          _
      $region12: #{tpu_custom_call.1} parent=5 // pred_fallthru
        _
      %p265 = scmp.lt.s32.totalorder %s24, 2
      // Predicated region
      $region29: #{tpu_custom_call.1} parent=5 // pred_check
        %p266 = pneg %p265
      $region30: #{tpu_custom_call.1} parent=5 // pred_check_branch
        %268 = sbr.rel (%p266) target = $region32
      $region31: #{tpu_custom_call.1} parent=5 // pred_region
        // Predicated region
        $region33: #{tpu_custom_call.1} parent=31 // pred_check
          %p269 = pneg %p58
        $region34: #{tpu_custom_call.1} parent=31 // pred_check_branch
          %271 = sbr.rel (%p269) target = $region36
        $region35: #{tpu_custom_call.1} parent=31 // pred_region
          %s272 = sand.u32 %s48, 1
          %s273 = scalar_lea.sflag [#allocation3], %s272
          %s274 = sand.u32 %s48, 1
          %s275 = smul.addr %s274, 8
          %s276 = scalar_lea.vmem [#allocation2], %s275
          %s278 = ssub.s32 128, 128
          %279 = vsyncadd %s273, %s278
          %s280 = sadd.s32 %s32, %s31
          %s281 = smul.addr %s280, 128
          %s282 = scalar_lea.hbm %s0, %s281
          %s284 = sshll.u32 %s276, 4
          %s285 = int_to_ptr.vmem [resolvable:$true] %s284
          %287 = dma.hbm_to_vmem [thread:$0]  %s282, 128, %s285, %s273
        $region36: #{tpu_custom_call.1} parent=31 // pred_fallthru
          _
      $region32: #{tpu_custom_call.1} parent=5 // pred_fallthru
        _
      %p288 = scmp.le.s32.totalorder 1, %s24
      %p289 = scmp.lt.s32.totalorder %s24, 3
      %p290 = pnand %p288, %p289
      %p291 = pneg %p290
      // Predicated region
      $region37: #{tpu_custom_call.1} parent=5 // pred_check
        _
      $region38: #{tpu_custom_call.1} parent=5 // pred_check_branch
        %293 = sbr.rel (%p290) target = $region40
      $region39: #{tpu_custom_call.1} parent=5 // pred_region
        %s294 = ssub.s32 %s24, 1
        %s295 = sand.u32 %s51, 1
        %s296 = scalar_lea.sflag [#allocation3], %s295
        %s297 = sand.u32 %s51, 1
        %s298 = smul.addr %s297, 8
        %s299 = scalar_lea.vmem [#allocation2], %s298
        // Predicated region
        $region41: #{tpu_custom_call.1} parent=39 // pred_check
          %p300 = pneg %p64
        $region42: #{tpu_custom_call.1} parent=39 // pred_check_branch
          %302 = sbr.rel (%p300) target = $region44
        $region43: #{tpu_custom_call.1} parent=39 // pred_region
          %303 = dma.done %s296, 128
        $region44: #{tpu_custom_call.1} parent=39 // pred_fallthru
          _
        // Predicated region
        $region45: #{tpu_custom_call.1} parent=39 // pred_check
          %p304 = pneg %p85
        $region46: #{tpu_custom_call.1} parent=39 // pred_check_branch
          %306 = sbr.rel (%p304) target = $region48
        $region47: #{tpu_custom_call.1} parent=39 // pred_region
          %307 = dma.done [#allocation6], 16
        $region48: #{tpu_custom_call.1} parent=39 // pred_fallthru
          _
        // Predicated region
        $region49: #{tpu_custom_call.1} parent=39 // pred_check
          %p308 = pneg %p106
        $region50: #{tpu_custom_call.1} parent=39 // pred_check_branch
          %310 = sbr.rel (%p308) target = $region52
        $region51: #{tpu_custom_call.1} parent=39 // pred_region
          %311 = dma.done [#allocation6], 16
        $region52: #{tpu_custom_call.1} parent=39 // pred_fallthru
          _
        // Predicated region
        $region53: #{tpu_custom_call.1} parent=39 // pred_check
          %p312 = pneg %p127
        $region54: #{tpu_custom_call.1} parent=39 // pred_check_branch
          %314 = sbr.rel (%p312) target = $region56
        $region55: #{tpu_custom_call.1} parent=39 // pred_region
          %315 = dma.done [#allocation9], 256
        $region56: #{tpu_custom_call.1} parent=39 // pred_fallthru
          _
        // Predicated region
        $region57: #{tpu_custom_call.1} parent=39 // pred_check
          %p316 = pneg %p148
        $region58: #{tpu_custom_call.1} parent=39 // pred_check_branch
          %318 = sbr.rel (%p316) target = $region60
        $region59: #{tpu_custom_call.1} parent=39 // pred_region
          %319 = dma.done [#allocation9], 16
        $region60: #{tpu_custom_call.1} parent=39 // pred_fallthru
          _
        %s320 = sand.u32 %s51, 1
        %s321 = scalar_lea.sflag [#allocation3], %s320
        %s322 = sand.u32 %s51, 1
        %s323 = smul.addr %s322, 8
        %s324 = scalar_lea.vmem [#allocation2], %s323
        %p325 = pneg %p64
        %p326 = pneg %p61
        %p327 = pneg %p85
        %p328 = pneg %p82
        %p329 = pneg %p106
        %p330 = pneg %p103
        %p331 = pneg %p127
        %p332 = pneg %p124
        %p333 = pneg %p148
        %p334 = pneg %p145
        %p335 = pneg %p176
        %p336 = pneg %p173
        %s337 = sand.u32 %s163, 1
        %s338 = scalar_lea.sflag [#allocation4], %s337
        %s339 = sand.u32 %s163, 1
        %s340 = smul.addr %s339, 16
        %s341 = scalar_lea.vmem [#allocation11], %s340
        %p342 = pneg %p204
        %p343 = pneg %p201
        %s344 = sand.u32 %s191, 1
        %s345 = scalar_lea.sflag [#allocation13], %s344
        %s346 = sand.u32 %s191, 1
        %s347 = smul.addr %s346, 16
        %s348 = scalar_lea.vmem [#allocation12], %s347
        %v350 = vld [vmem:[%s299] sm:$0xff]
        %v351 = vld [vmem:[#allocation5] sm:$0x1]
        %v352 = vld [vmem:[#allocation7] sm:$0x1]
        %vm353 = vcmask 261120
        %v354 = vsel %vm353, %v350, 0.0
        %355 = vadd.xlane.f32.xlu0 %v354
        %v356 = vpop.xlane.xlu0 %355
        %v357 = vrcp.pop 32.0
        %v358 = vmul.f32 %v356, %v357
        %v359 = vsub.f32 %v350, %v358
        %v360 = vmul.f32 %v359, %v359
        %v361 = vsel %vm353, %v360, 0.0
        %362 = vadd.xlane.f32.xlu0 %v361
        %v363 = vpop.xlane.xlu0 %362
        %v364 = vmul.f32 %v363, %v357
        %v365 = vadd.f32 %v364, 1e-05
        %v366 = vrsqrt.pop %v365
        %v367 = vmul.f32 %v359, %v366
        %v369 = vlaneseq
        %v370 = vshrl.u32 %v369, 7
        %v371 = vsub.s32 0, %v370
        %v372 = vrot.slane %v351, %v371
        %v374 = vmul.f32 %v367, %v372
        %v376 = vlaneseq
        %v377 = vshrl.u32 %v376, 7
        %v378 = vsub.s32 0, %v377
        %v379 = vrot.slane %v352, %v378
        %v381 = vadd.f32 %v374, %v379
        %v382 = vld [vmem:[#allocation8] sm:$0xf]
        %v383 = vld [vmem:[#allocation8 + $0x4] sm:$0xf]
        %v384 = vld [vmem:[#allocation8 + $0x8] sm:$0xf]
        %v385 = vld [vmem:[#allocation8 + $0xc] sm:$0xf]
        %v386 = vpack.c.bf16 %v381, %v381
        %v387 = vld [vmem:[#allocation10] sm:$0x1]
        %v389 = vlaneseq
        %v390 = vshrl.u32 %v389, 7
        %v391 = vsub.s32 0, %v390
        %v392 = vrot.slane %v387, %v391
        %v398 = vunpack.c.l.b16 %v382
        %v399 = vunpack.c.l.b16 %v383
        %v400 = vunpack.c.l.b16 %v384
        %v401 = vunpack.c.l.b16 %v385
        %v402 = vpack.c.b16 %v399, %v398
        %v403 = vpack.c.b16 %v401, %v400
        %v407 = vsel %vm353, %v386, 0
        %409 = vmatprep.subr.bf16.mxu0 0
        %410 = vmatpush1.bf16.msra.mxu0 %v402
        %411 = vmatprep.subr.bf16.mxu0 0
        %412 = vmatpush1.bf16.msra.mxu0 %v403
        %413 = vmatprep.subr.bf16.mxu0 0
        %414 = vmatpush1.bf16.msra.mxu0 0
        %415 = vmatprep.subr.bf16.mxu0 0
        %416 = vmatpush1.bf16.msra.mxu0 0
        %417 = vmatprep.subr.bf16.mxu0 0
        %418 = vmatpush1.bf16.msra.mxu0 0
        %419 = vmatprep.subr.bf16.mxu0 0
        %420 = vmatpush1.bf16.msra.mxu0 0
        %421 = vmatprep.subr.bf16.mxu0 0
        %422 = vmatpush1.bf16.msra.mxu0 0
        %423 = vmatprep.subr.bf16.mxu0 0
        %424 = vmatpush1.bf16.msra.mxu0 0
        %425 = vmatprep.subr.bf16.mxu0 0
        %426 = vmatpush1.bf16.msra.mxu0 0
        %427 = vmatprep.subr.bf16.mxu0 0
        %428 = vmatpush1.bf16.msra.mxu0 0
        %429 = vmatprep.subr.bf16.mxu0 0
        %430 = vmatpush1.bf16.msra.mxu0 0
        %431 = vmatprep.subr.bf16.mxu0 0
        %432 = vmatpush1.bf16.msra.mxu0 0
        %433 = vmatprep.subr.bf16.mxu0 0
        %434 = vmatpush1.bf16.msra.mxu0 0
        %435 = vmatprep.subr.bf16.mxu0 0
        %436 = vmatpush1.bf16.msra.mxu0 0
        %437 = vmatprep.subr.bf16.mxu0 0
        %438 = vmatpush1.bf16.msra.mxu0 0
        %439 = vmatprep.subr.bf16.mxu0 0
        %440 = vmatpush1.bf16.msra.mxu0 0
        %441 = vmatprep.mubr.bf16.mxu0 0
        %442 = vmatmul.mubr.bf16.gmra.mrb[0].mxu0 %v407
        %v443 = vpop.f32.mrb[0].mxu0
        %v444 = vadd.f32 %v392, %v443
        %v445 = vpop.f32.mrb[0].mxu0
        %v446 = vpop.f32.mrb[0].mxu0
        %v447 = vpop.f32.mrb[0].mxu0
        %448 = vdwg.mxu0
        %450 = vrot.lane.b32.xlu0 %v444, 120
        %v451 = vpop.permute.xlu0 %450
        %453 = vrot.lane.b32.xlu0 %v444, 112
        %v454 = vpop.permute.xlu0 %453
        %456 = vrot.lane.b32.xlu0 %v444, 104
        %v457 = vpop.permute.xlu0 %456
        %v459 = vcombine.low %v444, %v454
        %v460 = vcombine.high %v444, %v454
        %v462 = vunpack.c.l.s4 1983009808
        %v463 = vunpack.c.0.s8 %v462
        %v464 = vlaneseq
        %v465 = vshrl.u32 %v464, 7
        %v466 = vsub.s32 %v463, %v465
        %v467 = vrot.slane %v459, %v466
        %v469 = vunpack.c.l.s4 1983009808
        %v470 = vunpack.c.0.s8 %v469
        %v471 = vlaneseq
        %v472 = vshrl.u32 %v471, 7
        %v473 = vsub.s32 %v470, %v472
        %v474 = vrot.slane %v460, %v473
        %v475 = vcombine.low %v451, %v457
        %v476 = vcombine.high %v451, %v457
        %v478 = vunpack.c.l.s4 1983009808
        %v479 = vunpack.c.0.s8 %v478
        %v480 = vlaneseq
        %v481 = vshrl.u32 %v480, 7
        %v482 = vsub.s32 %v479, %v481
        %v483 = vrot.slane %v475, %v482
        %v485 = vunpack.c.l.s4 1983009808
        %v486 = vunpack.c.0.s8 %v485
        %v487 = vlaneseq
        %v488 = vshrl.u32 %v487, 7
        %v489 = vsub.s32 %v486, %v488
        %v490 = vrot.slane %v476, %v489
        %v491 = vcombine.low %v467, %v483
        %v492 = vcombine.high %v467, %v483
        %v494 = vunpack.c.l.s4 1934713408
        %v495 = vunpack.c.0.s8 %v494
        %v496 = vlaneseq
        %v497 = vshrl.u32 %v496, 7
        %v498 = vsub.s32 %v495, %v497
        %v499 = vrot.slane %v491, %v498
        %v501 = vunpack.c.l.s4 1934713408
        %v502 = vunpack.c.0.s8 %v501
        %v503 = vlaneseq
        %v504 = vshrl.u32 %v503, 7
        %v505 = vsub.s32 %v502, %v504
        %v506 = vrot.slane %v492, %v505
        %v507 = vcombine.low %v474, %v490
        %v508 = vcombine.high %v474, %v490
        %v510 = vunpack.c.l.s4 1934713408
        %v511 = vunpack.c.0.s8 %v510
        %v512 = vlaneseq
        %v513 = vshrl.u32 %v512, 7
        %v514 = vsub.s32 %v511, %v513
        %v515 = vrot.slane %v507, %v514
        %v517 = vunpack.c.l.s4 1934713408
        %v518 = vunpack.c.0.s8 %v517
        %v519 = vlaneseq
        %v520 = vshrl.u32 %v519, 7
        %v521 = vsub.s32 %v518, %v520
        %v522 = vrot.slane %v508, %v521
        %v523 = vcombine.high %v499, 0.0
        %v524 = vcombine.high %v506, 0.0
        %v525 = vcombine.high %v515, 0.0
        %v526 = vcombine.high %v522, 0.0
        %v527 = vcombine.low %v499, %v506
        %v529 = vunpack.c.l.s4 1983009808
        %v530 = vunpack.c.0.s8 %v529
        %v531 = vlaneseq
        %v532 = vshrl.u32 %v531, 7
        %v533 = vsub.s32 %v530, %v532
        %v534 = vrot.slane %v527, %v533
        %v535 = vcombine.low %v523, %v524
        %v537 = vunpack.c.l.s4 1983009808
        %v538 = vunpack.c.0.s8 %v537
        %v539 = vlaneseq
        %v540 = vshrl.u32 %v539, 7
        %v541 = vsub.s32 %v538, %v540
        %v542 = vrot.slane %v535, %v541
        %v543 = vcombine.low %v515, %v522
        %v545 = vunpack.c.l.s4 1983009808
        %v546 = vunpack.c.0.s8 %v545
        %v547 = vlaneseq
        %v548 = vshrl.u32 %v547, 7
        %v549 = vsub.s32 %v546, %v548
        %v550 = vrot.slane %v543, %v549
        %v551 = vcombine.low %v525, %v526
        %v553 = vunpack.c.l.s4 1983009808
        %v554 = vunpack.c.0.s8 %v553
        %v555 = vlaneseq
        %v556 = vshrl.u32 %v555, 7
        %v557 = vsub.s32 %v554, %v556
        %v558 = vrot.slane %v551, %v557
        %v559 = vcombine.low %v534, %v542
        %v560 = vcombine.high %v534, %v542
        %v562 = vunpack.c.l.s4 1934713408
        %v563 = vunpack.c.0.s8 %v562
        %v564 = vlaneseq
        %v565 = vshrl.u32 %v564, 7
        %v566 = vsub.s32 %v563, %v565
        %v567 = vrot.slane %v559, %v566
        %v569 = vunpack.c.l.s4 1934713408
        %v570 = vunpack.c.0.s8 %v569
        %v571 = vlaneseq
        %v572 = vshrl.u32 %v571, 7
        %v573 = vsub.s32 %v570, %v572
        %v574 = vrot.slane %v560, %v573
        %v575 = vcombine.low %v550, %v558
        %v576 = vcombine.high %v550, %v558
        %v578 = vunpack.c.l.s4 1934713408
        %v579 = vunpack.c.0.s8 %v578
        %v580 = vlaneseq
        %v581 = vshrl.u32 %v580, 7
        %v582 = vsub.s32 %v579, %v581
        %v583 = vrot.slane %v575, %v582
        %v585 = vunpack.c.l.s4 1934713408
        %v586 = vunpack.c.0.s8 %v585
        %v587 = vlaneseq
        %v588 = vshrl.u32 %v587, 7
        %v589 = vsub.s32 %v586, %v588
        %v590 = vrot.slane %v576, %v589
        %v591 = vcombine.low %v567, %v583
        %v592 = vcombine.high %v567, %v583
        %v593 = vcombine.low %v574, %v590
        %v594 = vcombine.high %v574, %v590
        %595 = vrot.lane.b32.xlu0 %v444, 96
        %v596 = vpop.permute.xlu0 %595
        %597 = vrot.lane.b32.xlu0 %v451, 96
        %v598 = vpop.permute.xlu0 %597
        %599 = vrot.lane.b32.xlu0 %v454, 96
        %v600 = vpop.permute.xlu0 %599
        %601 = vrot.lane.b32.xlu0 %v457, 96
        %v602 = vpop.permute.xlu0 %601
        %v607 = vcombine.low %v596, %v600
        %v608 = vcombine.high %v596, %v600
        %v610 = vunpack.c.l.s4 1983009808
        %v611 = vunpack.c.0.s8 %v610
        %v612 = vlaneseq
        %v613 = vshrl.u32 %v612, 7
        %v614 = vsub.s32 %v611, %v613
        %v615 = vrot.slane %v607, %v614
        %v617 = vunpack.c.l.s4 1983009808
        %v618 = vunpack.c.0.s8 %v617
        %v619 = vlaneseq
        %v620 = vshrl.u32 %v619, 7
        %v621 = vsub.s32 %v618, %v620
        %v622 = vrot.slane %v608, %v621
        %v623 = vcombine.low %v598, %v602
        %v624 = vcombine.high %v598, %v602
        %v626 = vunpack.c.l.s4 1983009808
        %v627 = vunpack.c.0.s8 %v626
        %v628 = vlaneseq
        %v629 = vshrl.u32 %v628, 7
        %v630 = vsub.s32 %v627, %v629
        %v631 = vrot.slane %v623, %v630
        %v633 = vunpack.c.l.s4 1983009808
        %v634 = vunpack.c.0.s8 %v633
        %v635 = vlaneseq
        %v636 = vshrl.u32 %v635, 7
        %v637 = vsub.s32 %v634, %v636
        %v638 = vrot.slane %v624, %v637
        %v639 = vcombine.low %v615, %v631
        %v640 = vcombine.high %v615, %v631
        %v642 = vunpack.c.l.s4 1934713408
        %v643 = vunpack.c.0.s8 %v642
        %v644 = vlaneseq
        %v645 = vshrl.u32 %v644, 7
        %v646 = vsub.s32 %v643, %v645
        %v647 = vrot.slane %v639, %v646
        %v649 = vunpack.c.l.s4 1934713408
        %v650 = vunpack.c.0.s8 %v649
        %v651 = vlaneseq
        %v652 = vshrl.u32 %v651, 7
        %v653 = vsub.s32 %v650, %v652
        %v654 = vrot.slane %v640, %v653
        %v655 = vcombine.low %v622, %v638
        %v656 = vcombine.high %v622, %v638
        %v658 = vunpack.c.l.s4 1934713408
        %v659 = vunpack.c.0.s8 %v658
        %v660 = vlaneseq
        %v661 = vshrl.u32 %v660, 7
        %v662 = vsub.s32 %v659, %v661
        %v663 = vrot.slane %v655, %v662
        %v665 = vunpack.c.l.s4 1934713408
        %v666 = vunpack.c.0.s8 %v665
        %v667 = vlaneseq
        %v668 = vshrl.u32 %v667, 7
        %v669 = vsub.s32 %v666, %v668
        %v670 = vrot.slane %v656, %v669
        %v671 = vcombine.high %v647, 0.0
        %v672 = vcombine.high %v654, 0.0
        %v673 = vcombine.high %v663, 0.0
        %v674 = vcombine.high %v670, 0.0
        %v675 = vcombine.low %v647, %v654
        %v677 = vunpack.c.l.s4 1983009808
        %v678 = vunpack.c.0.s8 %v677
        %v679 = vlaneseq
        %v680 = vshrl.u32 %v679, 7
        %v681 = vsub.s32 %v678, %v680
        %v682 = vrot.slane %v675, %v681
        %v683 = vcombine.low %v671, %v672
        %v685 = vunpack.c.l.s4 1983009808
        %v686 = vunpack.c.0.s8 %v685
        %v687 = vlaneseq
        %v688 = vshrl.u32 %v687, 7
        %v689 = vsub.s32 %v686, %v688
        %v690 = vrot.slane %v683, %v689
        %v691 = vcombine.low %v663, %v670
        %v693 = vunpack.c.l.s4 1983009808
        %v694 = vunpack.c.0.s8 %v693
        %v695 = vlaneseq
        %v696 = vshrl.u32 %v695, 7
        %v697 = vsub.s32 %v694, %v696
        %v698 = vrot.slane %v691, %v697
        %v699 = vcombine.low %v673, %v674
        %v701 = vunpack.c.l.s4 1983009808
        %v702 = vunpack.c.0.s8 %v701
        %v703 = vlaneseq
        %v704 = vshrl.u32 %v703, 7
        %v705 = vsub.s32 %v702, %v704
        %v706 = vrot.slane %v699, %v705
        %v707 = vcombine.low %v682, %v690
        %v708 = vcombine.high %v682, %v690
        %v710 = vunpack.c.l.s4 1934713408
        %v711 = vunpack.c.0.s8 %v710
        %v712 = vlaneseq
        %v713 = vshrl.u32 %v712, 7
        %v714 = vsub.s32 %v711, %v713
        %v715 = vrot.slane %v707, %v714
        %v717 = vunpack.c.l.s4 1934713408
        %v718 = vunpack.c.0.s8 %v717
        %v719 = vlaneseq
        %v720 = vshrl.u32 %v719, 7
        %v721 = vsub.s32 %v718, %v720
        %v722 = vrot.slane %v708, %v721
        %v723 = vcombine.low %v698, %v706
        %v724 = vcombine.high %v698, %v706
        %v726 = vunpack.c.l.s4 1934713408
        %v727 = vunpack.c.0.s8 %v726
        %v728 = vlaneseq
        %v729 = vshrl.u32 %v728, 7
        %v730 = vsub.s32 %v727, %v729
        %v731 = vrot.slane %v723, %v730
        %v733 = vunpack.c.l.s4 1934713408
        %v734 = vunpack.c.0.s8 %v733
        %v735 = vlaneseq
        %v736 = vshrl.u32 %v735, 7
        %v737 = vsub.s32 %v734, %v736
        %v738 = vrot.slane %v724, %v737
        %v739 = vcombine.low %v715, %v731
        %v740 = vcombine.high %v715, %v731
        %v741 = vcombine.low %v722, %v738
        %v742 = vcombine.high %v722, %v738
        %v743 = vpack.c.bf16 %v591, %v591
        %v744 = vpack.c.bf16 %v592, %v592
        %v745 = vpack.c.bf16 %v593, %v593
        %v746 = vpack.c.bf16 %v594, %v594
        %vm747 = vcmask 60416
        %748 = vst.msk [vmem:[%s341] sm:$0xf] %vm747, %v743
        %749 = vst.msk [vmem:[%s341 + $0x4] sm:$0xf] %vm747, %v744
        %750 = vst.msk [vmem:[%s341 + $0x8] sm:$0xf] %vm747, %v745
        %751 = vst.msk [vmem:[%s341 + $0xc] sm:$0xf] %vm747, %v746
        %v752 = vpack.c.bf16 %v739, %v739
        %v753 = vpack.c.bf16 %v740, %v740
        %v754 = vpack.c.bf16 %v741, %v741
        %v755 = vpack.c.bf16 %v742, %v742
        %756 = vst.msk [vmem:[%s348] sm:$0xf] %vm747, %v752
        %757 = vst.msk [vmem:[%s348 + $0x4] sm:$0xf] %vm747, %v753
        %758 = vst.msk [vmem:[%s348 + $0x8] sm:$0xf] %vm747, %v754
        %759 = vst.msk [vmem:[%s348 + $0xc] sm:$0xf] %vm747, %v755
        %s760 = sand.u32 %s163, 1
        %s761 = scalar_lea.sflag [#allocation4], %s760
        %s762 = sand.u32 %s163, 1
        %s763 = smul.addr %s762, 16
        %s764 = scalar_lea.vmem [#allocation11], %s763
        %s765 = sand.u32 %s191, 1
        %s766 = scalar_lea.sflag [#allocation13], %s765
        %s767 = sand.u32 %s191, 1
        %s768 = smul.addr %s767, 16
        %s769 = scalar_lea.vmem [#allocation12], %s768
        // Predicated region
        $region61: #{tpu_custom_call.1} parent=39 // pred_check
          %p770 = pneg %p173
        $region62: #{tpu_custom_call.1} parent=39 // pred_check_branch
          %772 = sbr.rel (%p770) target = $region64
        $region63: #{tpu_custom_call.1} parent=39 // pred_region
          %s774 = ssub.s32 256, 256
          %775 = vsyncadd %s761, %s774
          %s776 = smul.addr %s33, 4
          %s777 = sadd.s32 %s34, %s776
          %s778 = smul.addr %s777, 64
          %s779 = scalar_lea.hbm %s5, %s778
          %s780 = sshll.u32 %s764, 4
          %s781 = int_to_ptr.vmem [resolvable:$true] %s780
          %786 = dma.vmem_to_hbm [thread:$0]  %s781, 256, %s779, %s761, 64, 64, 4
        $region64: #{tpu_custom_call.1} parent=39 // pred_fallthru
          _
        // Predicated region
        $region65: #{tpu_custom_call.1} parent=39 // pred_check
          %p787 = pneg %p201
        $region66: #{tpu_custom_call.1} parent=39 // pred_check_branch
          %789 = sbr.rel (%p787) target = $region68
        $region67: #{tpu_custom_call.1} parent=39 // pred_region
          %s791 = ssub.s32 256, 256
          %792 = vsyncadd %s766, %s791
          %s793 = smul.addr %s33, 4
          %s794 = sadd.s32 %s34, %s793
          %s795 = smul.addr %s794, 64
          %s796 = scalar_lea.hbm %s6, %s795
          %s797 = sshll.u32 %s769, 4
          %s798 = int_to_ptr.vmem [resolvable:$true] %s797
          %803 = dma.vmem_to_hbm [thread:$0]  %s798, 256, %s796, %s766, 64, 64, 4
        $region68: #{tpu_custom_call.1} parent=39 // pred_fallthru
          _
      $region40: #{tpu_custom_call.1} parent=5 // pred_fallthru
        _
      %p804 = scmp.le.s32.totalorder 2, %s24
      // Predicated region
      $region69: #{tpu_custom_call.1} parent=5 // pred_check
        %p805 = pneg %p804
      $region70: #{tpu_custom_call.1} parent=5 // pred_check_branch
        %807 = sbr.rel (%p805) target = $region72
      $region71: #{tpu_custom_call.1} parent=5 // pred_region
        %s808 = ssub.s32 %s24, 2
        // Predicated region
        $region73: #{tpu_custom_call.1} parent=71 // pred_check
          %p809 = pneg %p179
        $region74: #{tpu_custom_call.1} parent=71 // pred_check_branch
          %811 = sbr.rel (%p809) target = $region76
        $region75: #{tpu_custom_call.1} parent=71 // pred_region
          %s812 = sand.u32 %s164, 1
          %s813 = scalar_lea.sflag [#allocation4], %s812
          %s814 = sand.u32 %s164, 1
          %s815 = smul.addr %s814, 16
          %s816 = scalar_lea.vmem [#allocation11], %s815
          %817 = dma.done %s813, 256
        $region76: #{tpu_custom_call.1} parent=71 // pred_fallthru
          _
        // Predicated region
        $region77: #{tpu_custom_call.1} parent=71 // pred_check
          %p818 = pneg %p207
        $region78: #{tpu_custom_call.1} parent=71 // pred_check_branch
          %820 = sbr.rel (%p818) target = $region80
        $region79: #{tpu_custom_call.1} parent=71 // pred_region
          %s821 = sand.u32 %s192, 1
          %s822 = scalar_lea.sflag [#allocation13], %s821
          %s823 = sand.u32 %s192, 1
          %s824 = smul.addr %s823, 16
          %s825 = scalar_lea.vmem [#allocation12], %s824
          %826 = dma.done %s822, 256
        $region80: #{tpu_custom_call.1} parent=71 // pred_fallthru
          _
      $region72: #{tpu_custom_call.1} parent=5 // pred_fallthru
        _
    $region6: #{tpu_custom_call.1} parent=1 // loop_footer
      %s28 = sadd.s32 1, %s24
    $region7: #{tpu_custom_call.1} parent=1 // loop_footer_branch
      %23 = sbr.rel target = $region3
    $region8: #{tpu_custom_call.1} parent=1 // loop_exit
      _
    %827 = vsyncpa [#allocation3], 1
    %s828 = scalar_lea.sflag [#allocation3], 1
    %829 = vsyncpa %s828, 1
    %830 = vsyncpa [#allocation6], 1
    %831 = vsyncpa [#allocation9], 1
    %832 = vsyncpa [#allocation4], 1
    %s833 = scalar_lea.sflag [#allocation4], 1
    %834 = vsyncpa %s833, 1
    %835 = vsyncpa [#allocation13], 1
    %s836 = scalar_lea.sflag [#allocation13], 1
    %837 = vsyncpa %s836, 1

</llo_original>
